<compile_context>
chip_gen: v5e
topology: v5e:2x2
jax: 0.10.0
libtpu: 0.0.40
codegen_flags: <defaults>
</compile_context>

<pallas_src>
import jax
import jax.numpy as jnp
from jax.experimental import pallas as pl
from jax.experimental.pallas import tpu as pltpu


def _mm(a, w):
    """MXU matmul with f32 accumulation. Casting the lhs to the weight dtype
    lets bf16 weights (v6e/v7x) use the native bf16 MXU path."""
    return jnp.dot(a.astype(w.dtype), w, preferred_element_type=jnp.float32)


# ----------------------------------------------------------------------------
# Single fused kernel: embedding + nlayers LSTM + decoder/log_softmax
# ----------------------------------------------------------------------------
def _make_fused_kernel(nlayers, T, B, H):
    N = T * B

    def kernel(*refs):
        ids_ref, emb_ref, h0_ref, c0_ref, iv_ref = refs[:5]
        layer_refs = refs[5:5 + 3 * nlayers]
        wd_ref, wi_ref, bd_ref = refs[5 + 3 * nlayers:8 + 3 * nlayers]
        dec_ref, hT_ref, cT_ref = refs[8 + 3 * nlayers:]

        # ---- 1) Embedding gather as a one-hot matmul (table resident in VMEM)
        ids = ids_ref[...]                                        # (N, 1) int32
        ntoken = emb_ref.shape[0]
        iota = jax.lax.broadcasted_iota(jnp.int32, (N, ntoken), 1)
        one_hot = (iota == ids).astype(emb_ref.dtype)             # (N, ntoken)
        x2d = _mm(one_hot, emb_ref[...])                          # (N, ninp) f32
        # dropout == identity (eval mode)

        # ---- 2) Multi-layer LSTM; time loop fully in-kernel (static unroll),
        #         input-side gate matmul hoisted out of the recurrence.
        for l in range(nlayers):
            wih_v = layer_refs[3 * l][...]        # (I_l, 4H)
            whh_v = layer_refs[3 * l + 1][...]    # (H, 4H)
            b_v = layer_refs[3 * l + 2][...]      # (1, 4H) = b_ih + b_hh
            # One big (N, I_l) x (I_l, 4H) matmul for the whole sequence.
            xg = _mm(x2d, wih_v) + b_v.astype(jnp.float32)        # (N, 4H)

            h = h0_ref[l].astype(jnp.float32)                     # (B, H)
            c = c0_ref[l].astype(jnp.float32)
            ys = []
            for t in range(T):                                    # static unroll
                g = xg[t * B:(t + 1) * B, :] + _mm(h, whh_v)      # (B, 4H)
                # PyTorch gate order: i, f, g, o
                i_g = jax.nn.sigmoid(g[:, 0 * H:1 * H])
                f_g = jax.nn.sigmoid(g[:, 1 * H:2 * H])
                g_g = jnp.tanh(g[:, 2 * H:3 * H])
                o_g = jax.nn.sigmoid(g[:, 3 * H:4 * H])
                c = f_g * c + i_g * g_g
                h = o_g * jnp.tanh(c)
                ys.append(h)
            # Final states written exactly once per layer.
            hT_ref[l] = h.astype(hT_ref.dtype)
            cT_ref[l] = c.astype(cT_ref.dtype)
            # inter-layer dropout == identity (eval mode)
            x2d = jnp.concatenate(ys, axis=0)                     # (N, H)

        # ---- 3) Fused decoder + (amp-folded) ivec projection + log_softmax
        logits = (_mm(x2d, wd_ref[...]) + _mm(iv_ref[...], wi_ref[...])
                  + bd_ref[...].astype(jnp.float32))              # (N, V)
        m = jnp.max(logits, axis=-1, keepdims=True)
        z = logits - m
        lse = jnp.log(jnp.sum(jnp.exp(z), axis=-1, keepdims=True))
        dec_ref[...] = (z - lse).astype(dec_ref.dtype)

    return kernel


def output_enhanced_lm_forward(prep, token_ids, hidden, ivec):
    """token_ids: (T, B) int; hidden: ((L,B,H),(L,B,H)); ivec: (T, B, D)."""
    h0, c0 = hidden
    nlayers, B, H = h0.shape
    T = token_ids.shape[0]
    N = T * B
    V = prep["w_dec_t"].shape[-1]

    ids = token_ids.reshape(N, 1).astype(jnp.int32)
    iv2d = ivec.reshape(N, -1)

    flat_w = []
    for (wih_t, whh_t, b_fused) in prep["lstm"]:
        flat_w += [wih_t, whh_t, b_fused]

    inputs = [ids, prep["emb"], h0, c0, iv2d] + flat_w + [
        prep["w_dec_t"], prep["w_ivec_t"], prep["b_fused"]]

    def _full_spec(x):
        return pl.BlockSpec(x.shape, lambda i, _nd=x.ndim: (0,) * _nd)

    in_specs = [_full_spec(x) for x in inputs]
    out_specs = (
        pl.BlockSpec((N, V), lambda i: (0, 0)),
        pl.BlockSpec((nlayers, B, H), lambda i: (0, 0, 0)),
        pl.BlockSpec((nlayers, B, H), lambda i: (0, 0, 0)),
    )
    out_shape = (
        jax.ShapeDtypeStruct((N, V), jnp.float32),
        jax.ShapeDtypeStruct((nlayers, B, H), h0.dtype),
        jax.ShapeDtypeStruct((nlayers, B, H), c0.dtype),
    )

    dec, hT, cT = pl.pallas_call(
        _make_fused_kernel(nlayers, T, B, H),
        out_shape=out_shape,
        grid_spec=pltpu.PrefetchScalarGridSpec(
            num_scalar_prefetch=0,
            grid=(1,),                     # single grid point; all work in-kernel
            in_specs=in_specs,
            out_specs=out_specs,
        ),
        compiler_params=pltpu.CompilerParams(
            dimension_semantics=("arbitrary",)),
    )(*inputs)
    return dec.reshape(T, B, V), (hT, cT)


# ----------------------------------------------------------------------------
# Parameter init (PyTorch layout) + one-time prep (transpose / fuse / fold)
# ----------------------------------------------------------------------------
def init_params(key, ntoken, ninp, nhid, nlayers, ivec_dim):
    keys = iter(jax.random.split(key, 4 + 4 * nlayers))
    initrange = 0.1
    bound = 1.0 / (nhid ** 0.5)
    emb = jax.random.uniform(next(keys), (ntoken, ninp), jnp.float32,
                             -initrange, initrange)
    lstm = []
    for l in range(nlayers):
        in_l = ninp if l == 0 else nhid
        w_ih = jax.random.uniform(next(keys), (4 * nhid, in_l), jnp.float32, -bound, bound)
        w_hh = jax.random.uniform(next(keys), (4 * nhid, nhid), jnp.float32, -bound, bound)
        b_ih = jax.random.uniform(next(keys), (4 * nhid,), jnp.float32, -bound, bound)
        b_hh = jax.random.uniform(next(keys), (4 * nhid,), jnp.float32, -bound, bound)
        lstm.append((w_ih, w_hh, b_ih, b_hh))
    w_dec = jax.random.uniform(next(keys), (ntoken, nhid), jnp.float32,
                               -initrange, initrange)
    b_dec = jnp.zeros((ntoken,), jnp.float32)
    w_ivec = jax.random.uniform(next(keys), (ntoken, ivec_dim), jnp.float32,
                                -initrange, initrange)
    b_ivec = jax.random.uniform(next(keys), (ntoken,), jnp.float32,
                                -initrange, initrange)
    return dict(emb=emb, lstm=lstm, w_dec=w_dec, b_dec=b_dec,
                w_ivec=w_ivec, b_ivec=b_ivec)


def prepare_params(raw, ivec_amplification, weight_dtype=jnp.float32):
    """One-time prep: transpose weights, fuse biases, fold ivec amplification.
    weight_dtype=jnp.bfloat16 halves weight VMEM and uses the native bf16 MXU
    on v6e/v7x (f32 accumulation is kept inside the kernel)."""
    lstm = []
    for (w_ih, w_hh, b_ih, b_hh) in raw["lstm"]:
        four_h = w_ih.shape[0]
        lstm.append((jnp.asarray(w_ih.T, weight_dtype),                  # (in, 4H)
                     jnp.asarray(w_hh.T, weight_dtype),                  # (H, 4H)
                     (b_ih + b_hh).reshape(1, four_h).astype(jnp.float32)))
    return dict(
        emb=jnp.asarray(raw["emb"], weight_dtype),
        lstm=lstm,
        w_dec_t=jnp.asarray(raw["w_dec"].T, weight_dtype),               # (H, V)
        w_ivec_t=jnp.asarray(ivec_amplification * raw["w_ivec"].T,
                             weight_dtype),                              # (D, V)
        b_fused=(raw["b_dec"] + raw["b_ivec"]).reshape(1, -1).astype(jnp.float32),
    )


# ----------------------------------------------------------------------------
# Pure-JAX reference
# ----------------------------------------------------------------------------
def forward_reference(raw, token_ids, hidden, ivec, ivec_amplification):
    x = raw["emb"][token_ids]
    h0_all, c0_all = hidden
    h_fin, c_fin = [], []
    for l, (w_ih, w_hh, b_ih, b_hh) in enumerate(raw["lstm"]):
        def step(carry, xt, w_ih=w_ih, w_hh=w_hh, b_ih=b_ih, b_hh=b_hh):
            h, c = carry
            gates = xt @ w_ih.T + b_ih + h @ w_hh.T + b_hh
            i, f, g, o = jnp.split(gates, 4, axis=-1)
            i = jax.nn.sigmoid(i); f = jax.nn.sigmoid(f)
            g = jnp.tanh(g); o = jax.nn.sigmoid(o)
            c = f * c + i * g
            h = o * jnp.tanh(c)
            return (h, c), h
        (hT, cT), ys = jax.lax.scan(step, (h0_all[l], c0_all[l]), x)
        x = ys
        h_fin.append(hT); c_fin.append(cT)
    logits = (x @ raw["w_dec"].T + raw["b_dec"]
              + (ivec_amplification * ivec) @ raw["w_ivec"].T + raw["b_ivec"])
    decoded = jax.nn.log_softmax(logits, axis=2)
    return decoded, (jnp.stack(h_fin), jnp.stack(c_fin))


if __name__ == "__main__":
    ntoken, ninp, nhid, nlayers, ivec_dim = 256, 32, 32, 2, 16
    seq_len, batch = 8, 4
    ivec_amplification = 1.5

    key = jax.random.PRNGKey(0)
    k_params, k_tok, k_ivec, k_h, k_c = jax.random.split(key, 5)

    raw = init_params(k_params, ntoken, ninp, nhid, nlayers, ivec_dim)
    # Use weight_dtype=jnp.bfloat16 on v6e/v7x for the MXU/DMA win; f32 here so
    # the numerical check against the f32 reference is tight.
    prep = prepare_params(raw, ivec_amplification, weight_dtype=jnp.float32)

    token_ids = jax.random.randint(k_tok, (seq_len, batch), 0, ntoken,
                                   dtype=jnp.int32)
    ivec = jax.random.normal(k_ivec, (seq_len, batch, ivec_dim), jnp.float32)
    hidden = (0.1 * jax.random.normal(k_h, (nlayers, batch, nhid), jnp.float32),
              0.1 * jax.random.normal(k_c, (nlayers, batch, nhid), jnp.float32))

    fwd = jax.jit(output_enhanced_lm_forward)
    decoded, (hT, cT) = fwd(prep, token_ids, hidden, ivec)
    decoded = jax.block_until_ready(decoded)

    ref_dec, (ref_h, ref_c) = forward_reference(raw, token_ids, hidden, ivec,
                                                ivec_amplification)
    assert decoded.shape == (seq_len, batch, ntoken)
    assert jnp.allclose(decoded, ref_dec, atol=2e-3, rtol=2e-3), "decoded mismatch"
    assert jnp.allclose(hT, ref_h, atol=2e-3, rtol=2e-3), "h_T mismatch"
    assert jnp.allclose(cT, ref_c, atol=2e-3, rtol=2e-3), "c_T mismatch"

    print("KERNEL_OK")
</pallas_src>

<mosaic_0001>
module attributes {stable_mosaic.version = 11 : i64} {
  func.func @kernel(%arg0: i32, %arg1: memref<32x1xi32, #tpu.memory_space<vmem>>, %arg2: memref<256x32xf32, #tpu.memory_space<vmem>>, %arg3: memref<2x4x32xf32, #tpu.memory_space<vmem>>, %arg4: memref<2x4x32xf32, #tpu.memory_space<vmem>>, %arg5: memref<32x16xf32, #tpu.memory_space<vmem>>, %arg6: memref<32x128xf32, #tpu.memory_space<vmem>>, %arg7: memref<32x128xf32, #tpu.memory_space<vmem>>, %arg8: memref<1x128xf32, #tpu.memory_space<vmem>>, %arg9: memref<32x128xf32, #tpu.memory_space<vmem>>, %arg10: memref<32x128xf32, #tpu.memory_space<vmem>>, %arg11: memref<1x128xf32, #tpu.memory_space<vmem>>, %arg12: memref<32x256xf32, #tpu.memory_space<vmem>>, %arg13: memref<16x256xf32, #tpu.memory_space<vmem>>, %arg14: memref<1x256xf32, #tpu.memory_space<vmem>>, %arg15: memref<32x256xf32, #tpu.memory_space<vmem>>, %arg16: memref<2x4x32xf32, #tpu.memory_space<vmem>>, %arg17: memref<2x4x32xf32, #tpu.memory_space<vmem>>) attributes {dimension_semantics = [#tpu.dimension_semantics<arbitrary>], iteration_bounds = array<i64: 1>, scalar_prefetch = 0 : i64, scratch_operands = 0 : i64, tpu.core_type = #tpu.core_type<tc>, window_params = [{pipeline_mode = #tpu.pipeline_mode<synchronous>, transform_indices = @transform_0, window_bounds = array<i64: 32, 1>}, {pipeline_mode = #tpu.pipeline_mode<synchronous>, transform_indices = @transform_1, window_bounds = array<i64: 256, 32>}, {pipeline_mode = #tpu.pipeline_mode<synchronous>, transform_indices = @transform_2, window_bounds = array<i64: 2, 4, 32>}, {pipeline_mode = #tpu.pipeline_mode<synchronous>, transform_indices = @transform_3, window_bounds = array<i64: 2, 4, 32>}, {pipeline_mode = #tpu.pipeline_mode<synchronous>, transform_indices = @transform_4, window_bounds = array<i64: 32, 16>}, {pipeline_mode = #tpu.pipeline_mode<synchronous>, transform_indices = @transform_5, window_bounds = array<i64: 32, 128>}, {pipeline_mode = #tpu.pipeline_mode<synchronous>, transform_indices = @transform_6, window_bounds = array<i64: 32, 128>}, {pipeline_mode = #tpu.pipeline_mode<synchronous>, transform_indices = @transform_7, window_bounds = array<i64: 1, 128>}, {pipeline_mode = #tpu.pipeline_mode<synchronous>, transform_indices = @transform_8, window_bounds = array<i64: 32, 128>}, {pipeline_mode = #tpu.pipeline_mode<synchronous>, transform_indices = @transform_9, window_bounds = array<i64: 32, 128>}, {pipeline_mode = #tpu.pipeline_mode<synchronous>, transform_indices = @transform_10, window_bounds = array<i64: 1, 128>}, {pipeline_mode = #tpu.pipeline_mode<synchronous>, transform_indices = @transform_11, window_bounds = array<i64: 32, 256>}, {pipeline_mode = #tpu.pipeline_mode<synchronous>, transform_indices = @transform_12, window_bounds = array<i64: 16, 256>}, {pipeline_mode = #tpu.pipeline_mode<synchronous>, transform_indices = @transform_13, window_bounds = array<i64: 1, 256>}, {pipeline_mode = #tpu.pipeline_mode<synchronous>, transform_indices = @transform_14, window_bounds = array<i64: 32, 256>}, {pipeline_mode = #tpu.pipeline_mode<synchronous>, transform_indices = @transform_15, window_bounds = array<i64: 2, 4, 32>}, {pipeline_mode = #tpu.pipeline_mode<synchronous>, transform_indices = @transform_16, window_bounds = array<i64: 2, 4, 32>}]} {
    %c0 = arith.constant 0 : index
    %c0_0 = arith.constant 0 : index
    %0 = vector.load %arg1[%c0, %c0_0] : memref<32x1xi32, #tpu.memory_space<vmem>>, vector<32x1xi32>
    %1 = tpu.iota {dimensions = array<i32: 1>} : vector<32x256xi32>
    %2 = vector.broadcast %0 : vector<32x1xi32> to vector<32x256xi32>
    %3 = arith.cmpi eq, %1, %2 : vector<32x256xi32>
    %4 = arith.extui %3 : vector<32x256xi1> to vector<32x256xi32>
    %5 = arith.sitofp %4 : vector<32x256xi32> to vector<32x256xf32>
    %c0_1 = arith.constant 0 : index
    %c0_2 = arith.constant 0 : index
    %6 = vector.load %arg2[%c0_1, %c0_2] : memref<256x32xf32, #tpu.memory_space<vmem>>, vector<256x32xf32>
    %cst = arith.constant dense<0.000000e+00> : vector<32x32xf32>
    %7 = tpu.matmul %5, %6, %cst {dimension_numbers = #tpu.dot_dimension_numbers<[1], [0], [0], [1], [0, 0, 1, 1], [], []>} : vector<32x256xf32>, vector<256x32xf32>, vector<32x32xf32> -> vector<32x32xf32>
    %c0_3 = arith.constant 0 : index
    %c0_4 = arith.constant 0 : index
    %8 = vector.load %arg6[%c0_3, %c0_4] : memref<32x128xf32, #tpu.memory_space<vmem>>, vector<32x128xf32>
    %c0_5 = arith.constant 0 : index
    %c0_6 = arith.constant 0 : index
    %9 = vector.load %arg7[%c0_5, %c0_6] : memref<32x128xf32, #tpu.memory_space<vmem>>, vector<32x128xf32>
    %c0_7 = arith.constant 0 : index
    %c0_8 = arith.constant 0 : index
    %10 = vector.load %arg8[%c0_7, %c0_8] : memref<1x128xf32, #tpu.memory_space<vmem>>, vector<1x128xf32>
    %cst_9 = arith.constant dense<0.000000e+00> : vector<32x128xf32>
    %11 = tpu.matmul %7, %8, %cst_9 {dimension_numbers = #tpu.dot_dimension_numbers<[1], [0], [0], [1], [0, 0, 1, 1], [], []>} : vector<32x32xf32>, vector<32x128xf32>, vector<32x128xf32> -> vector<32x128xf32>
    %12 = vector.broadcast %10 : vector<1x128xf32> to vector<32x128xf32>
    %13 = arith.addf %11, %12 : vector<32x128xf32>
    %c0_10 = arith.constant 0 : index
    %c0_11 = arith.constant 0 : index
    %c0_12 = arith.constant 0 : index
    %14 = vector.load %arg3[%c0_10, %c0_11, %c0_12] : memref<2x4x32xf32, #tpu.memory_space<vmem>>, vector<1x4x32xf32>
    %15 = vector.shape_cast %14 : vector<1x4x32xf32> to vector<4x32xf32>
    %c0_13 = arith.constant 0 : index
    %c0_14 = arith.constant 0 : index
    %c0_15 = arith.constant 0 : index
    %16 = vector.load %arg4[%c0_13, %c0_14, %c0_15] : memref<2x4x32xf32, #tpu.memory_space<vmem>>, vector<1x4x32xf32>
    %17 = vector.shape_cast %16 : vector<1x4x32xf32> to vector<4x32xf32>
    %18 = vector.extract_strided_slice %13 {offsets = [0, 0], sizes = [4, 128], strides = [1, 1]} : vector<32x128xf32> to vector<4x128xf32>
    %cst_16 = arith.constant dense<0.000000e+00> : vector<4x128xf32>
    %19 = tpu.matmul %15, %9, %cst_16 {dimension_numbers = #tpu.dot_dimension_numbers<[1], [0], [0], [1], [0, 0, 1, 1], [], []>} : vector<4x32xf32>, vector<32x128xf32>, vector<4x128xf32> -> vector<4x128xf32>
    %20 = arith.addf %18, %19 : vector<4x128xf32>
    %21 = vector.extract_strided_slice %20 {offsets = [0, 0], sizes = [4, 32], strides = [1, 1]} : vector<4x128xf32> to vector<4x32xf32>
    %22 = arith.negf %21 : vector<4x32xf32>
    %23 = math.exp %22 : vector<4x32xf32>
    %cst_17 = arith.constant 1.000000e+00 : f32
    %24 = vector.broadcast %cst_17 : f32 to vector<4x32xf32>
    %25 = arith.addf %24, %23 : vector<4x32xf32>
    %26 = arith.divf %24, %25 : vector<4x32xf32>
    %27 = vector.extract_strided_slice %20 {offsets = [0, 32], sizes = [4, 32], strides = [1, 1]} : vector<4x128xf32> to vector<4x32xf32>
    %28 = arith.negf %27 : vector<4x32xf32>
    %29 = math.exp %28 : vector<4x32xf32>
    %cst_18 = arith.constant 1.000000e+00 : f32
    %30 = vector.broadcast %cst_18 : f32 to vector<4x32xf32>
    %31 = arith.addf %30, %29 : vector<4x32xf32>
    %32 = arith.divf %30, %31 : vector<4x32xf32>
    %33 = vector.extract_strided_slice %20 {offsets = [0, 64], sizes = [4, 32], strides = [1, 1]} : vector<4x128xf32> to vector<4x32xf32>
    %34 = math.tanh %33 : vector<4x32xf32>
    %35 = vector.extract_strided_slice %20 {offsets = [0, 96], sizes = [4, 32], strides = [1, 1]} : vector<4x128xf32> to vector<4x32xf32>
    %36 = arith.negf %35 : vector<4x32xf32>
    %37 = math.exp %36 : vector<4x32xf32>
    %cst_19 = arith.constant 1.000000e+00 : f32
    %38 = vector.broadcast %cst_19 : f32 to vector<4x32xf32>
    %39 = arith.addf %38, %37 : vector<4x32xf32>
    %40 = arith.divf %38, %39 : vector<4x32xf32>
    %41 = arith.mulf %32, %17 : vector<4x32xf32>
    %42 = arith.mulf %26, %34 : vector<4x32xf32>
    %43 = arith.addf %41, %42 : vector<4x32xf32>
    %44 = math.tanh %43 : vector<4x32xf32>
    %45 = arith.mulf %40, %44 : vector<4x32xf32>
    %46 = vector.extract_strided_slice %13 {offsets = [4, 0], sizes = [4, 128], strides = [1, 1]} : vector<32x128xf32> to vector<4x128xf32>
    %cst_20 = arith.constant dense<0.000000e+00> : vector<4x128xf32>
    %47 = tpu.matmul %45, %9, %cst_20 {dimension_numbers = #tpu.dot_dimension_numbers<[1], [0], [0], [1], [0, 0, 1, 1], [], []>} : vector<4x32xf32>, vector<32x128xf32>, vector<4x128xf32> -> vector<4x128xf32>
    %48 = arith.addf %46, %47 : vector<4x128xf32>
    %49 = vector.extract_strided_slice %48 {offsets = [0, 0], sizes = [4, 32], strides = [1, 1]} : vector<4x128xf32> to vector<4x32xf32>
    %50 = arith.negf %49 : vector<4x32xf32>
    %51 = math.exp %50 : vector<4x32xf32>
    %cst_21 = arith.constant 1.000000e+00 : f32
    %52 = vector.broadcast %cst_21 : f32 to vector<4x32xf32>
    %53 = arith.addf %52, %51 : vector<4x32xf32>
    %54 = arith.divf %52, %53 : vector<4x32xf32>
    %55 = vector.extract_strided_slice %48 {offsets = [0, 32], sizes = [4, 32], strides = [1, 1]} : vector<4x128xf32> to vector<4x32xf32>
    %56 = arith.negf %55 : vector<4x32xf32>
    %57 = math.exp %56 : vector<4x32xf32>
    %cst_22 = arith.constant 1.000000e+00 : f32
    %58 = vector.broadcast %cst_22 : f32 to vector<4x32xf32>
    %59 = arith.addf %58, %57 : vector<4x32xf32>
    %60 = arith.divf %58, %59 : vector<4x32xf32>
    %61 = vector.extract_strided_slice %48 {offsets = [0, 64], sizes = [4, 32], strides = [1, 1]} : vector<4x128xf32> to vector<4x32xf32>
    %62 = math.tanh %61 : vector<4x32xf32>
    %63 = vector.extract_strided_slice %48 {offsets = [0, 96], sizes = [4, 32], strides = [1, 1]} : vector<4x128xf32> to vector<4x32xf32>
    %64 = arith.negf %63 : vector<4x32xf32>
    %65 = math.exp %64 : vector<4x32xf32>
    %cst_23 = arith.constant 1.000000e+00 : f32
    %66 = vector.broadcast %cst_23 : f32 to vector<4x32xf32>
    %67 = arith.addf %66, %65 : vector<4x32xf32>
    %68 = arith.divf %66, %67 : vector<4x32xf32>
    %69 = arith.mulf %60, %43 : vector<4x32xf32>
    %70 = arith.mulf %54, %62 : vector<4x32xf32>
    %71 = arith.addf %69, %70 : vector<4x32xf32>
    %72 = math.tanh %71 : vector<4x32xf32>
    %73 = arith.mulf %68, %72 : vector<4x32xf32>
    %74 = vector.extract_strided_slice %13 {offsets = [8, 0], sizes = [4, 128], strides = [1, 1]} : vector<32x128xf32> to vector<4x128xf32>
    %cst_24 = arith.constant dense<0.000000e+00> : vector<4x128xf32>
    %75 = tpu.matmul %73, %9, %cst_24 {dimension_numbers = #tpu.dot_dimension_numbers<[1], [0], [0], [1], [0, 0, 1, 1], [], []>} : vector<4x32xf32>, vector<32x128xf32>, vector<4x128xf32> -> vector<4x128xf32>
    %76 = arith.addf %74, %75 : vector<4x128xf32>
    %77 = vector.extract_strided_slice %76 {offsets = [0, 0], sizes = [4, 32], strides = [1, 1]} : vector<4x128xf32> to vector<4x32xf32>
    %78 = arith.negf %77 : vector<4x32xf32>
    %79 = math.exp %78 : vector<4x32xf32>
    %cst_25 = arith.constant 1.000000e+00 : f32
    %80 = vector.broadcast %cst_25 : f32 to vector<4x32xf32>
    %81 = arith.addf %80, %79 : vector<4x32xf32>
    %82 = arith.divf %80, %81 : vector<4x32xf32>
    %83 = vector.extract_strided_slice %76 {offsets = [0, 32], sizes = [4, 32], strides = [1, 1]} : vector<4x128xf32> to vector<4x32xf32>
    %84 = arith.negf %83 : vector<4x32xf32>
    %85 = math.exp %84 : vector<4x32xf32>
    %cst_26 = arith.constant 1.000000e+00 : f32
    %86 = vector.broadcast %cst_26 : f32 to vector<4x32xf32>
    %87 = arith.addf %86, %85 : vector<4x32xf32>
    %88 = arith.divf %86, %87 : vector<4x32xf32>
    %89 = vector.extract_strided_slice %76 {offsets = [0, 64], sizes = [4, 32], strides = [1, 1]} : vector<4x128xf32> to vector<4x32xf32>
    %90 = math.tanh %89 : vector<4x32xf32>
    %91 = vector.extract_strided_slice %76 {offsets = [0, 96], sizes = [4, 32], strides = [1, 1]} : vector<4x128xf32> to vector<4x32xf32>
    %92 = arith.negf %91 : vector<4x32xf32>
    %93 = math.exp %92 : vector<4x32xf32>
    %cst_27 = arith.constant 1.000000e+00 : f32
    %94 = vector.broadcast %cst_27 : f32 to vector<4x32xf32>
    %95 = arith.addf %94, %93 : vector<4x32xf32>
    %96 = arith.divf %94, %95 : vector<4x32xf32>
    %97 = arith.mulf %88, %71 : vector<4x32xf32>
    %98 = arith.mulf %82, %90 : vector<4x32xf32>
    %99 = arith.addf %97, %98 : vector<4x32xf32>
    %100 = math.tanh %99 : vector<4x32xf32>
    %101 = arith.mulf %96, %100 : vector<4x32xf32>
    %102 = vector.extract_strided_slice %13 {offsets = [12, 0], sizes = [4, 128], strides = [1, 1]} : vector<32x128xf32> to vector<4x128xf32>
    %cst_28 = arith.constant dense<0.000000e+00> : vector<4x128xf32>
    %103 = tpu.matmul %101, %9, %cst_28 {dimension_numbers = #tpu.dot_dimension_numbers<[1], [0], [0], [1], [0, 0, 1, 1], [], []>} : vector<4x32xf32>, vector<32x128xf32>, vector<4x128xf32> -> vector<4x128xf32>
    %104 = arith.addf %102, %103 : vector<4x128xf32>
    %105 = vector.extract_strided_slice %104 {offsets = [0, 0], sizes = [4, 32], strides = [1, 1]} : vector<4x128xf32> to vector<4x32xf32>
    %106 = arith.negf %105 : vector<4x32xf32>
    %107 = math.exp %106 : vector<4x32xf32>
    %cst_29 = arith.constant 1.000000e+00 : f32
    %108 = vector.broadcast %cst_29 : f32 to vector<4x32xf32>
    %109 = arith.addf %108, %107 : vector<4x32xf32>
    %110 = arith.divf %108, %109 : vector<4x32xf32>
    %111 = vector.extract_strided_slice %104 {offsets = [0, 32], sizes = [4, 32], strides = [1, 1]} : vector<4x128xf32> to vector<4x32xf32>
    %112 = arith.negf %111 : vector<4x32xf32>
    %113 = math.exp %112 : vector<4x32xf32>
    %cst_30 = arith.constant 1.000000e+00 : f32
    %114 = vector.broadcast %cst_30 : f32 to vector<4x32xf32>
    %115 = arith.addf %114, %113 : vector<4x32xf32>
    %116 = arith.divf %114, %115 : vector<4x32xf32>
    %117 = vector.extract_strided_slice %104 {offsets = [0, 64], sizes = [4, 32], strides = [1, 1]} : vector<4x128xf32> to vector<4x32xf32>
    %118 = math.tanh %117 : vector<4x32xf32>
    %119 = vector.extract_strided_slice %104 {offsets = [0, 96], sizes = [4, 32], strides = [1, 1]} : vector<4x128xf32> to vector<4x32xf32>
    %120 = arith.negf %119 : vector<4x32xf32>
    %121 = math.exp %120 : vector<4x32xf32>
    %cst_31 = arith.constant 1.000000e+00 : f32
    %122 = vector.broadcast %cst_31 : f32 to vector<4x32xf32>
    %123 = arith.addf %122, %121 : vector<4x32xf32>
    %124 = arith.divf %122, %123 : vector<4x32xf32>
    %125 = arith.mulf %116, %99 : vector<4x32xf32>
    %126 = arith.mulf %110, %118 : vector<4x32xf32>
    %127 = arith.addf %125, %126 : vector<4x32xf32>
    %128 = math.tanh %127 : vector<4x32xf32>
    %129 = arith.mulf %124, %128 : vector<4x32xf32>
    %130 = vector.extract_strided_slice %13 {offsets = [16, 0], sizes = [4, 128], strides = [1, 1]} : vector<32x128xf32> to vector<4x128xf32>
    %cst_32 = arith.constant dense<0.000000e+00> : vector<4x128xf32>
    %131 = tpu.matmul %129, %9, %cst_32 {dimension_numbers = #tpu.dot_dimension_numbers<[1], [0], [0], [1], [0, 0, 1, 1], [], []>} : vector<4x32xf32>, vector<32x128xf32>, vector<4x128xf32> -> vector<4x128xf32>
    %132 = arith.addf %130, %131 : vector<4x128xf32>
    %133 = vector.extract_strided_slice %132 {offsets = [0, 0], sizes = [4, 32], strides = [1, 1]} : vector<4x128xf32> to vector<4x32xf32>
    %134 = arith.negf %133 : vector<4x32xf32>
    %135 = math.exp %134 : vector<4x32xf32>
    %cst_33 = arith.constant 1.000000e+00 : f32
    %136 = vector.broadcast %cst_33 : f32 to vector<4x32xf32>
    %137 = arith.addf %136, %135 : vector<4x32xf32>
    %138 = arith.divf %136, %137 : vector<4x32xf32>
    %139 = vector.extract_strided_slice %132 {offsets = [0, 32], sizes = [4, 32], strides = [1, 1]} : vector<4x128xf32> to vector<4x32xf32>
    %140 = arith.negf %139 : vector<4x32xf32>
    %141 = math.exp %140 : vector<4x32xf32>
    %cst_34 = arith.constant 1.000000e+00 : f32
    %142 = vector.broadcast %cst_34 : f32 to vector<4x32xf32>
    %143 = arith.addf %142, %141 : vector<4x32xf32>
    %144 = arith.divf %142, %143 : vector<4x32xf32>
    %145 = vector.extract_strided_slice %132 {offsets = [0, 64], sizes = [4, 32], strides = [1, 1]} : vector<4x128xf32> to vector<4x32xf32>
    %146 = math.tanh %145 : vector<4x32xf32>
    %147 = vector.extract_strided_slice %132 {offsets = [0, 96], sizes = [4, 32], strides = [1, 1]} : vector<4x128xf32> to vector<4x32xf32>
    %148 = arith.negf %147 : vector<4x32xf32>
    %149 = math.exp %148 : vector<4x32xf32>
    %cst_35 = arith.constant 1.000000e+00 : f32
    %150 = vector.broadcast %cst_35 : f32 to vector<4x32xf32>
    %151 = arith.addf %150, %149 : vector<4x32xf32>
    %152 = arith.divf %150, %151 : vector<4x32xf32>
    %153 = arith.mulf %144, %127 : vector<4x32xf32>
    %154 = arith.mulf %138, %146 : vector<4x32xf32>
    %155 = arith.addf %153, %154 : vector<4x32xf32>
    %156 = math.tanh %155 : vector<4x32xf32>
    %157 = arith.mulf %152, %156 : vector<4x32xf32>
    %158 = vector.extract_strided_slice %13 {offsets = [20, 0], sizes = [4, 128], strides = [1, 1]} : vector<32x128xf32> to vector<4x128xf32>
    %cst_36 = arith.constant dense<0.000000e+00> : vector<4x128xf32>
    %159 = tpu.matmul %157, %9, %cst_36 {dimension_numbers = #tpu.dot_dimension_numbers<[1], [0], [0], [1], [0, 0, 1, 1], [], []>} : vector<4x32xf32>, vector<32x128xf32>, vector<4x128xf32> -> vector<4x128xf32>
    %160 = arith.addf %158, %159 : vector<4x128xf32>
    %161 = vector.extract_strided_slice %160 {offsets = [0, 0], sizes = [4, 32], strides = [1, 1]} : vector<4x128xf32> to vector<4x32xf32>
    %162 = arith.negf %161 : vector<4x32xf32>
    %163 = math.exp %162 : vector<4x32xf32>
    %cst_37 = arith.constant 1.000000e+00 : f32
    %164 = vector.broadcast %cst_37 : f32 to vector<4x32xf32>
    %165 = arith.addf %164, %163 : vector<4x32xf32>
    %166 = arith.divf %164, %165 : vector<4x32xf32>
    %167 = vector.extract_strided_slice %160 {offsets = [0, 32], sizes = [4, 32], strides = [1, 1]} : vector<4x128xf32> to vector<4x32xf32>
    %168 = arith.negf %167 : vector<4x32xf32>
    %169 = math.exp %168 : vector<4x32xf32>
    %cst_38 = arith.constant 1.000000e+00 : f32
    %170 = vector.broadcast %cst_38 : f32 to vector<4x32xf32>
    %171 = arith.addf %170, %169 : vector<4x32xf32>
    %172 = arith.divf %170, %171 : vector<4x32xf32>
    %173 = vector.extract_strided_slice %160 {offsets = [0, 64], sizes = [4, 32], strides = [1, 1]} : vector<4x128xf32> to vector<4x32xf32>
    %174 = math.tanh %173 : vector<4x32xf32>
    %175 = vector.extract_strided_slice %160 {offsets = [0, 96], sizes = [4, 32], strides = [1, 1]} : vector<4x128xf32> to vector<4x32xf32>
    %176 = arith.negf %175 : vector<4x32xf32>
    %177 = math.exp %176 : vector<4x32xf32>
    %cst_39 = arith.constant 1.000000e+00 : f32
    %178 = vector.broadcast %cst_39 : f32 to vector<4x32xf32>
    %179 = arith.addf %178, %177 : vector<4x32xf32>
    %180 = arith.divf %178, %179 : vector<4x32xf32>
    %181 = arith.mulf %172, %155 : vector<4x32xf32>
    %182 = arith.mulf %166, %174 : vector<4x32xf32>
    %183 = arith.addf %181, %182 : vector<4x32xf32>
    %184 = math.tanh %183 : vector<4x32xf32>
    %185 = arith.mulf %180, %184 : vector<4x32xf32>
    %186 = vector.extract_strided_slice %13 {offsets = [24, 0], sizes = [4, 128], strides = [1, 1]} : vector<32x128xf32> to vector<4x128xf32>
    %cst_40 = arith.constant dense<0.000000e+00> : vector<4x128xf32>
    %187 = tpu.matmul %185, %9, %cst_40 {dimension_numbers = #tpu.dot_dimension_numbers<[1], [0], [0], [1], [0, 0, 1, 1], [], []>} : vector<4x32xf32>, vector<32x128xf32>, vector<4x128xf32> -> vector<4x128xf32>
    %188 = arith.addf %186, %187 : vector<4x128xf32>
    %189 = vector.extract_strided_slice %188 {offsets = [0, 0], sizes = [4, 32], strides = [1, 1]} : vector<4x128xf32> to vector<4x32xf32>
    %190 = arith.negf %189 : vector<4x32xf32>
    %191 = math.exp %190 : vector<4x32xf32>
    %cst_41 = arith.constant 1.000000e+00 : f32
    %192 = vector.broadcast %cst_41 : f32 to vector<4x32xf32>
    %193 = arith.addf %192, %191 : vector<4x32xf32>
    %194 = arith.divf %192, %193 : vector<4x32xf32>
    %195 = vector.extract_strided_slice %188 {offsets = [0, 32], sizes = [4, 32], strides = [1, 1]} : vector<4x128xf32> to vector<4x32xf32>
    %196 = arith.negf %195 : vector<4x32xf32>
    %197 = math.exp %196 : vector<4x32xf32>
    %cst_42 = arith.constant 1.000000e+00 : f32
    %198 = vector.broadcast %cst_42 : f32 to vector<4x32xf32>
    %199 = arith.addf %198, %197 : vector<4x32xf32>
    %200 = arith.divf %198, %199 : vector<4x32xf32>
    %201 = vector.extract_strided_slice %188 {offsets = [0, 64], sizes = [4, 32], strides = [1, 1]} : vector<4x128xf32> to vector<4x32xf32>
    %202 = math.tanh %201 : vector<4x32xf32>
    %203 = vector.extract_strided_slice %188 {offsets = [0, 96], sizes = [4, 32], strides = [1, 1]} : vector<4x128xf32> to vector<4x32xf32>
    %204 = arith.negf %203 : vector<4x32xf32>
    %205 = math.exp %204 : vector<4x32xf32>
    %cst_43 = arith.constant 1.000000e+00 : f32
    %206 = vector.broadcast %cst_43 : f32 to vector<4x32xf32>
    %207 = arith.addf %206, %205 : vector<4x32xf32>
    %208 = arith.divf %206, %207 : vector<4x32xf32>
    %209 = arith.mulf %200, %183 : vector<4x32xf32>
    %210 = arith.mulf %194, %202 : vector<4x32xf32>
    %211 = arith.addf %209, %210 : vector<4x32xf32>
    %212 = math.tanh %211 : vector<4x32xf32>
    %213 = arith.mulf %208, %212 : vector<4x32xf32>
    %214 = vector.extract_strided_slice %13 {offsets = [28, 0], sizes = [4, 128], strides = [1, 1]} : vector<32x128xf32> to vector<4x128xf32>
    %cst_44 = arith.constant dense<0.000000e+00> : vector<4x128xf32>
    %215 = tpu.matmul %213, %9, %cst_44 {dimension_numbers = #tpu.dot_dimension_numbers<[1], [0], [0], [1], [0, 0, 1, 1], [], []>} : vector<4x32xf32>, vector<32x128xf32>, vector<4x128xf32> -> vector<4x128xf32>
    %216 = arith.addf %214, %215 : vector<4x128xf32>
    %217 = vector.extract_strided_slice %216 {offsets = [0, 0], sizes = [4, 32], strides = [1, 1]} : vector<4x128xf32> to vector<4x32xf32>
    %218 = arith.negf %217 : vector<4x32xf32>
    %219 = math.exp %218 : vector<4x32xf32>
    %cst_45 = arith.constant 1.000000e+00 : f32
    %220 = vector.broadcast %cst_45 : f32 to vector<4x32xf32>
    %221 = arith.addf %220, %219 : vector<4x32xf32>
    %222 = arith.divf %220, %221 : vector<4x32xf32>
    %223 = vector.extract_strided_slice %216 {offsets = [0, 32], sizes = [4, 32], strides = [1, 1]} : vector<4x128xf32> to vector<4x32xf32>
    %224 = arith.negf %223 : vector<4x32xf32>
    %225 = math.exp %224 : vector<4x32xf32>
    %cst_46 = arith.constant 1.000000e+00 : f32
    %226 = vector.broadcast %cst_46 : f32 to vector<4x32xf32>
    %227 = arith.addf %226, %225 : vector<4x32xf32>
    %228 = arith.divf %226, %227 : vector<4x32xf32>
    %229 = vector.extract_strided_slice %216 {offsets = [0, 64], sizes = [4, 32], strides = [1, 1]} : vector<4x128xf32> to vector<4x32xf32>
    %230 = math.tanh %229 : vector<4x32xf32>
    %231 = vector.extract_strided_slice %216 {offsets = [0, 96], sizes = [4, 32], strides = [1, 1]} : vector<4x128xf32> to vector<4x32xf32>
    %232 = arith.negf %231 : vector<4x32xf32>
    %233 = math.exp %232 : vector<4x32xf32>
    %cst_47 = arith.constant 1.000000e+00 : f32
    %234 = vector.broadcast %cst_47 : f32 to vector<4x32xf32>
    %235 = arith.addf %234, %233 : vector<4x32xf32>
    %236 = arith.divf %234, %235 : vector<4x32xf32>
    %237 = arith.mulf %228, %211 : vector<4x32xf32>
    %238 = arith.mulf %222, %230 : vector<4x32xf32>
    %239 = arith.addf %237, %238 : vector<4x32xf32>
    %240 = math.tanh %239 : vector<4x32xf32>
    %241 = arith.mulf %236, %240 : vector<4x32xf32>
    %c0_48 = arith.constant 0 : index
    %c0_49 = arith.constant 0 : index
    %c0_50 = arith.constant 0 : index
    %242 = vector.load %arg16[%c0_48, %c0_49, %c0_50] : memref<2x4x32xf32, #tpu.memory_space<vmem>>, vector<1x4x32xf32>
    %243 = vector.shape_cast %242 : vector<1x4x32xf32> to vector<4x32xf32>
    %244 = vector.shape_cast %241 : vector<4x32xf32> to vector<1x4x32xf32>
    tpu.vector_store %arg16[%c0_48, %c0_49, %c0_50], %244 {strides = array<i32>} : memref<2x4x32xf32, #tpu.memory_space<vmem>>, vector<1x4x32xf32>,
    %c0_51 = arith.constant 0 : index
    %c0_52 = arith.constant 0 : index
    %c0_53 = arith.constant 0 : index
    %245 = vector.load %arg17[%c0_51, %c0_52, %c0_53] : memref<2x4x32xf32, #tpu.memory_space<vmem>>, vector<1x4x32xf32>
    %246 = vector.shape_cast %245 : vector<1x4x32xf32> to vector<4x32xf32>
    %247 = vector.shape_cast %239 : vector<4x32xf32> to vector<1x4x32xf32>
    tpu.vector_store %arg17[%c0_51, %c0_52, %c0_53], %247 {strides = array<i32>} : memref<2x4x32xf32, #tpu.memory_space<vmem>>, vector<1x4x32xf32>,
    %248 = tpu.concatenate %45, %73, %101, %129, %157, %185, %213, %241 in 0 : vector<4x32xf32>, vector<4x32xf32>, vector<4x32xf32>, vector<4x32xf32>, vector<4x32xf32>, vector<4x32xf32>, vector<4x32xf32>, vector<4x32xf32> -> vector<32x32xf32>
    %c0_54 = arith.constant 0 : index
    %c0_55 = arith.constant 0 : index
    %249 = vector.load %arg9[%c0_54, %c0_55] : memref<32x128xf32, #tpu.memory_space<vmem>>, vector<32x128xf32>
    %c0_56 = arith.constant 0 : index
    %c0_57 = arith.constant 0 : index
    %250 = vector.load %arg10[%c0_56, %c0_57] : memref<32x128xf32, #tpu.memory_space<vmem>>, vector<32x128xf32>
    %c0_58 = arith.constant 0 : index
    %c0_59 = arith.constant 0 : index
    %251 = vector.load %arg11[%c0_58, %c0_59] : memref<1x128xf32, #tpu.memory_space<vmem>>, vector<1x128xf32>
    %cst_60 = arith.constant dense<0.000000e+00> : vector<32x128xf32>
    %252 = tpu.matmul %248, %249, %cst_60 {dimension_numbers = #tpu.dot_dimension_numbers<[1], [0], [0], [1], [0, 0, 1, 1], [], []>} : vector<32x32xf32>, vector<32x128xf32>, vector<32x128xf32> -> vector<32x128xf32>
    %253 = vector.broadcast %251 : vector<1x128xf32> to vector<32x128xf32>
    %254 = arith.addf %252, %253 : vector<32x128xf32>
    %c1 = arith.constant 1 : index
    %c0_61 = arith.constant 0 : index
    %c0_62 = arith.constant 0 : index
    %255 = vector.load %arg3[%c1, %c0_61, %c0_62] : memref<2x4x32xf32, #tpu.memory_space<vmem>>, vector<1x4x32xf32>
    %256 = vector.shape_cast %255 : vector<1x4x32xf32> to vector<4x32xf32>
    %c1_63 = arith.constant 1 : index
    %c0_64 = arith.constant 0 : index
    %c0_65 = arith.constant 0 : index
    %257 = vector.load %arg4[%c1_63, %c0_64, %c0_65] : memref<2x4x32xf32, #tpu.memory_space<vmem>>, vector<1x4x32xf32>
    %258 = vector.shape_cast %257 : vector<1x4x32xf32> to vector<4x32xf32>
    %259 = vector.extract_strided_slice %254 {offsets = [0, 0], sizes = [4, 128], strides = [1, 1]} : vector<32x128xf32> to vector<4x128xf32>
    %cst_66 = arith.constant dense<0.000000e+00> : vector<4x128xf32>
    %260 = tpu.matmul %256, %250, %cst_66 {dimension_numbers = #tpu.dot_dimension_numbers<[1], [0], [0], [1], [0, 0, 1, 1], [], []>} : vector<4x32xf32>, vector<32x128xf32>, vector<4x128xf32> -> vector<4x128xf32>
    %261 = arith.addf %259, %260 : vector<4x128xf32>
    %262 = vector.extract_strided_slice %261 {offsets = [0, 0], sizes = [4, 32], strides = [1, 1]} : vector<4x128xf32> to vector<4x32xf32>
    %263 = arith.negf %262 : vector<4x32xf32>
    %264 = math.exp %263 : vector<4x32xf32>
    %cst_67 = arith.constant 1.000000e+00 : f32
    %265 = vector.broadcast %cst_67 : f32 to vector<4x32xf32>
    %266 = arith.addf %265, %264 : vector<4x32xf32>
    %267 = arith.divf %265, %266 : vector<4x32xf32>
    %268 = vector.extract_strided_slice %261 {offsets = [0, 32], sizes = [4, 32], strides = [1, 1]} : vector<4x128xf32> to vector<4x32xf32>
    %269 = arith.negf %268 : vector<4x32xf32>
    %270 = math.exp %269 : vector<4x32xf32>
    %cst_68 = arith.constant 1.000000e+00 : f32
    %271 = vector.broadcast %cst_68 : f32 to vector<4x32xf32>
    %272 = arith.addf %271, %270 : vector<4x32xf32>
    %273 = arith.divf %271, %272 : vector<4x32xf32>
    %274 = vector.extract_strided_slice %261 {offsets = [0, 64], sizes = [4, 32], strides = [1, 1]} : vector<4x128xf32> to vector<4x32xf32>
    %275 = math.tanh %274 : vector<4x32xf32>
    %276 = vector.extract_strided_slice %261 {offsets = [0, 96], sizes = [4, 32], strides = [1, 1]} : vector<4x128xf32> to vector<4x32xf32>
    %277 = arith.negf %276 : vector<4x32xf32>
    %278 = math.exp %277 : vector<4x32xf32>
    %cst_69 = arith.constant 1.000000e+00 : f32
    %279 = vector.broadcast %cst_69 : f32 to vector<4x32xf32>
    %280 = arith.addf %279, %278 : vector<4x32xf32>
    %281 = arith.divf %279, %280 : vector<4x32xf32>
    %282 = arith.mulf %273, %258 : vector<4x32xf32>
    %283 = arith.mulf %267, %275 : vector<4x32xf32>
    %284 = arith.addf %282, %283 : vector<4x32xf32>
    %285 = math.tanh %284 : vector<4x32xf32>
    %286 = arith.mulf %281, %285 : vector<4x32xf32>
    %287 = vector.extract_strided_slice %254 {offsets = [4, 0], sizes = [4, 128], strides = [1, 1]} : vector<32x128xf32> to vector<4x128xf32>
    %cst_70 = arith.constant dense<0.000000e+00> : vector<4x128xf32>
    %288 = tpu.matmul %286, %250, %cst_70 {dimension_numbers = #tpu.dot_dimension_numbers<[1], [0], [0], [1], [0, 0, 1, 1], [], []>} : vector<4x32xf32>, vector<32x128xf32>, vector<4x128xf32> -> vector<4x128xf32>
    %289 = arith.addf %287, %288 : vector<4x128xf32>
    %290 = vector.extract_strided_slice %289 {offsets = [0, 0], sizes = [4, 32], strides = [1, 1]} : vector<4x128xf32> to vector<4x32xf32>
    %291 = arith.negf %290 : vector<4x32xf32>
    %292 = math.exp %291 : vector<4x32xf32>
    %cst_71 = arith.constant 1.000000e+00 : f32
    %293 = vector.broadcast %cst_71 : f32 to vector<4x32xf32>
    %294 = arith.addf %293, %292 : vector<4x32xf32>
    %295 = arith.divf %293, %294 : vector<4x32xf32>
    %296 = vector.extract_strided_slice %289 {offsets = [0, 32], sizes = [4, 32], strides = [1, 1]} : vector<4x128xf32> to vector<4x32xf32>
    %297 = arith.negf %296 : vector<4x32xf32>
    %298 = math.exp %297 : vector<4x32xf32>
    %cst_72 = arith.constant 1.000000e+00 : f32
    %299 = vector.broadcast %cst_72 : f32 to vector<4x32xf32>
    %300 = arith.addf %299, %298 : vector<4x32xf32>
    %301 = arith.divf %299, %300 : vector<4x32xf32>
    %302 = vector.extract_strided_slice %289 {offsets = [0, 64], sizes = [4, 32], strides = [1, 1]} : vector<4x128xf32> to vector<4x32xf32>
    %303 = math.tanh %302 : vector<4x32xf32>
    %304 = vector.extract_strided_slice %289 {offsets = [0, 96], sizes = [4, 32], strides = [1, 1]} : vector<4x128xf32> to vector<4x32xf32>
    %305 = arith.negf %304 : vector<4x32xf32>
    %306 = math.exp %305 : vector<4x32xf32>
    %cst_73 = arith.constant 1.000000e+00 : f32
    %307 = vector.broadcast %cst_73 : f32 to vector<4x32xf32>
    %308 = arith.addf %307, %306 : vector<4x32xf32>
    %309 = arith.divf %307, %308 : vector<4x32xf32>
    %310 = arith.mulf %301, %284 : vector<4x32xf32>
    %311 = arith.mulf %295, %303 : vector<4x32xf32>
    %312 = arith.addf %310, %311 : vector<4x32xf32>
    %313 = math.tanh %312 : vector<4x32xf32>
    %314 = arith.mulf %309, %313 : vector<4x32xf32>
    %315 = vector.extract_strided_slice %254 {offsets = [8, 0], sizes = [4, 128], strides = [1, 1]} : vector<32x128xf32> to vector<4x128xf32>
    %cst_74 = arith.constant dense<0.000000e+00> : vector<4x128xf32>
    %316 = tpu.matmul %314, %250, %cst_74 {dimension_numbers = #tpu.dot_dimension_numbers<[1], [0], [0], [1], [0, 0, 1, 1], [], []>} : vector<4x32xf32>, vector<32x128xf32>, vector<4x128xf32> -> vector<4x128xf32>
    %317 = arith.addf %315, %316 : vector<4x128xf32>
    %318 = vector.extract_strided_slice %317 {offsets = [0, 0], sizes = [4, 32], strides = [1, 1]} : vector<4x128xf32> to vector<4x32xf32>
    %319 = arith.negf %318 : vector<4x32xf32>
    %320 = math.exp %319 : vector<4x32xf32>
    %cst_75 = arith.constant 1.000000e+00 : f32
    %321 = vector.broadcast %cst_75 : f32 to vector<4x32xf32>
    %322 = arith.addf %321, %320 : vector<4x32xf32>
    %323 = arith.divf %321, %322 : vector<4x32xf32>
    %324 = vector.extract_strided_slice %317 {offsets = [0, 32], sizes = [4, 32], strides = [1, 1]} : vector<4x128xf32> to vector<4x32xf32>
    %325 = arith.negf %324 : vector<4x32xf32>
    %326 = math.exp %325 : vector<4x32xf32>
    %cst_76 = arith.constant 1.000000e+00 : f32
    %327 = vector.broadcast %cst_76 : f32 to vector<4x32xf32>
    %328 = arith.addf %327, %326 : vector<4x32xf32>
    %329 = arith.divf %327, %328 : vector<4x32xf32>
    %330 = vector.extract_strided_slice %317 {offsets = [0, 64], sizes = [4, 32], strides = [1, 1]} : vector<4x128xf32> to vector<4x32xf32>
    %331 = math.tanh %330 : vector<4x32xf32>
    %332 = vector.extract_strided_slice %317 {offsets = [0, 96], sizes = [4, 32], strides = [1, 1]} : vector<4x128xf32> to vector<4x32xf32>
    %333 = arith.negf %332 : vector<4x32xf32>
    %334 = math.exp %333 : vector<4x32xf32>
    %cst_77 = arith.constant 1.000000e+00 : f32
    %335 = vector.broadcast %cst_77 : f32 to vector<4x32xf32>
    %336 = arith.addf %335, %334 : vector<4x32xf32>
    %337 = arith.divf %335, %336 : vector<4x32xf32>
    %338 = arith.mulf %329, %312 : vector<4x32xf32>
    %339 = arith.mulf %323, %331 : vector<4x32xf32>
    %340 = arith.addf %338, %339 : vector<4x32xf32>
    %341 = math.tanh %340 : vector<4x32xf32>
    %342 = arith.mulf %337, %341 : vector<4x32xf32>
    %343 = vector.extract_strided_slice %254 {offsets = [12, 0], sizes = [4, 128], strides = [1, 1]} : vector<32x128xf32> to vector<4x128xf32>
    %cst_78 = arith.constant dense<0.000000e+00> : vector<4x128xf32>
    %344 = tpu.matmul %342, %250, %cst_78 {dimension_numbers = #tpu.dot_dimension_numbers<[1], [0], [0], [1], [0, 0, 1, 1], [], []>} : vector<4x32xf32>, vector<32x128xf32>, vector<4x128xf32> -> vector<4x128xf32>
    %345 = arith.addf %343, %344 : vector<4x128xf32>
    %346 = vector.extract_strided_slice %345 {offsets = [0, 0], sizes = [4, 32], strides = [1, 1]} : vector<4x128xf32> to vector<4x32xf32>
    %347 = arith.negf %346 : vector<4x32xf32>
    %348 = math.exp %347 : vector<4x32xf32>
    %cst_79 = arith.constant 1.000000e+00 : f32
    %349 = vector.broadcast %cst_79 : f32 to vector<4x32xf32>
    %350 = arith.addf %349, %348 : vector<4x32xf32>
    %351 = arith.divf %349, %350 : vector<4x32xf32>
    %352 = vector.extract_strided_slice %345 {offsets = [0, 32], sizes = [4, 32], strides = [1, 1]} : vector<4x128xf32> to vector<4x32xf32>
    %353 = arith.negf %352 : vector<4x32xf32>
    %354 = math.exp %353 : vector<4x32xf32>
    %cst_80 = arith.constant 1.000000e+00 : f32
    %355 = vector.broadcast %cst_80 : f32 to vector<4x32xf32>
    %356 = arith.addf %355, %354 : vector<4x32xf32>
    %357 = arith.divf %355, %356 : vector<4x32xf32>
    %358 = vector.extract_strided_slice %345 {offsets = [0, 64], sizes = [4, 32], strides = [1, 1]} : vector<4x128xf32> to vector<4x32xf32>
    %359 = math.tanh %358 : vector<4x32xf32>
    %360 = vector.extract_strided_slice %345 {offsets = [0, 96], sizes = [4, 32], strides = [1, 1]} : vector<4x128xf32> to vector<4x32xf32>
    %361 = arith.negf %360 : vector<4x32xf32>
    %362 = math.exp %361 : vector<4x32xf32>
    %cst_81 = arith.constant 1.000000e+00 : f32
    %363 = vector.broadcast %cst_81 : f32 to vector<4x32xf32>
    %364 = arith.addf %363, %362 : vector<4x32xf32>
    %365 = arith.divf %363, %364 : vector<4x32xf32>
    %366 = arith.mulf %357, %340 : vector<4x32xf32>
    %367 = arith.mulf %351, %359 : vector<4x32xf32>
    %368 = arith.addf %366, %367 : vector<4x32xf32>
    %369 = math.tanh %368 : vector<4x32xf32>
    %370 = arith.mulf %365, %369 : vector<4x32xf32>
    %371 = vector.extract_strided_slice %254 {offsets = [16, 0], sizes = [4, 128], strides = [1, 1]} : vector<32x128xf32> to vector<4x128xf32>
    %cst_82 = arith.constant dense<0.000000e+00> : vector<4x128xf32>
    %372 = tpu.matmul %370, %250, %cst_82 {dimension_numbers = #tpu.dot_dimension_numbers<[1], [0], [0], [1], [0, 0, 1, 1], [], []>} : vector<4x32xf32>, vector<32x128xf32>, vector<4x128xf32> -> vector<4x128xf32>
    %373 = arith.addf %371, %372 : vector<4x128xf32>
    %374 = vector.extract_strided_slice %373 {offsets = [0, 0], sizes = [4, 32], strides = [1, 1]} : vector<4x128xf32> to vector<4x32xf32>
    %375 = arith.negf %374 : vector<4x32xf32>
    %376 = math.exp %375 : vector<4x32xf32>
    %cst_83 = arith.constant 1.000000e+00 : f32
    %377 = vector.broadcast %cst_83 : f32 to vector<4x32xf32>
    %378 = arith.addf %377, %376 : vector<4x32xf32>
    %379 = arith.divf %377, %378 : vector<4x32xf32>
    %380 = vector.extract_strided_slice %373 {offsets = [0, 32], sizes = [4, 32], strides = [1, 1]} : vector<4x128xf32> to vector<4x32xf32>
    %381 = arith.negf %380 : vector<4x32xf32>
    %382 = math.exp %381 : vector<4x32xf32>
    %cst_84 = arith.constant 1.000000e+00 : f32
    %383 = vector.broadcast %cst_84 : f32 to vector<4x32xf32>
    %384 = arith.addf %383, %382 : vector<4x32xf32>
    %385 = arith.divf %383, %384 : vector<4x32xf32>
    %386 = vector.extract_strided_slice %373 {offsets = [0, 64], sizes = [4, 32], strides = [1, 1]} : vector<4x128xf32> to vector<4x32xf32>
    %387 = math.tanh %386 : vector<4x32xf32>
    %388 = vector.extract_strided_slice %373 {offsets = [0, 96], sizes = [4, 32], strides = [1, 1]} : vector<4x128xf32> to vector<4x32xf32>
    %389 = arith.negf %388 : vector<4x32xf32>
    %390 = math.exp %389 : vector<4x32xf32>
    %cst_85 = arith.constant 1.000000e+00 : f32
    %391 = vector.broadcast %cst_85 : f32 to vector<4x32xf32>
    %392 = arith.addf %391, %390 : vector<4x32xf32>
    %393 = arith.divf %391, %392 : vector<4x32xf32>
    %394 = arith.mulf %385, %368 : vector<4x32xf32>
    %395 = arith.mulf %379, %387 : vector<4x32xf32>
    %396 = arith.addf %394, %395 : vector<4x32xf32>
    %397 = math.tanh %396 : vector<4x32xf32>
    %398 = arith.mulf %393, %397 : vector<4x32xf32>
    %399 = vector.extract_strided_slice %254 {offsets = [20, 0], sizes = [4, 128], strides = [1, 1]} : vector<32x128xf32> to vector<4x128xf32>
    %cst_86 = arith.constant dense<0.000000e+00> : vector<4x128xf32>
    %400 = tpu.matmul %398, %250, %cst_86 {dimension_numbers = #tpu.dot_dimension_numbers<[1], [0], [0], [1], [0, 0, 1, 1], [], []>} : vector<4x32xf32>, vector<32x128xf32>, vector<4x128xf32> -> vector<4x128xf32>
    %401 = arith.addf %399, %400 : vector<4x128xf32>
    %402 = vector.extract_strided_slice %401 {offsets = [0, 0], sizes = [4, 32], strides = [1, 1]} : vector<4x128xf32> to vector<4x32xf32>
    %403 = arith.negf %402 : vector<4x32xf32>
    %404 = math.exp %403 : vector<4x32xf32>
    %cst_87 = arith.constant 1.000000e+00 : f32
    %405 = vector.broadcast %cst_87 : f32 to vector<4x32xf32>
    %406 = arith.addf %405, %404 : vector<4x32xf32>
    %407 = arith.divf %405, %406 : vector<4x32xf32>
    %408 = vector.extract_strided_slice %401 {offsets = [0, 32], sizes = [4, 32], strides = [1, 1]} : vector<4x128xf32> to vector<4x32xf32>
    %409 = arith.negf %408 : vector<4x32xf32>
    %410 = math.exp %409 : vector<4x32xf32>
    %cst_88 = arith.constant 1.000000e+00 : f32
    %411 = vector.broadcast %cst_88 : f32 to vector<4x32xf32>
    %412 = arith.addf %411, %410 : vector<4x32xf32>
    %413 = arith.divf %411, %412 : vector<4x32xf32>
    %414 = vector.extract_strided_slice %401 {offsets = [0, 64], sizes = [4, 32], strides = [1, 1]} : vector<4x128xf32> to vector<4x32xf32>
    %415 = math.tanh %414 : vector<4x32xf32>
    %416 = vector.extract_strided_slice %401 {offsets = [0, 96], sizes = [4, 32], strides = [1, 1]} : vector<4x128xf32> to vector<4x32xf32>
    %417 = arith.negf %416 : vector<4x32xf32>
    %418 = math.exp %417 : vector<4x32xf32>
    %cst_89 = arith.constant 1.000000e+00 : f32
    %419 = vector.broadcast %cst_89 : f32 to vector<4x32xf32>
    %420 = arith.addf %419, %418 : vector<4x32xf32>
    %421 = arith.divf %419, %420 : vector<4x32xf32>
    %422 = arith.mulf %413, %396 : vector<4x32xf32>
    %423 = arith.mulf %407, %415 : vector<4x32xf32>
    %424 = arith.addf %422, %423 : vector<4x32xf32>
    %425 = math.tanh %424 : vector<4x32xf32>
    %426 = arith.mulf %421, %425 : vector<4x32xf32>
    %427 = vector.extract_strided_slice %254 {offsets = [24, 0], sizes = [4, 128], strides = [1, 1]} : vector<32x128xf32> to vector<4x128xf32>
    %cst_90 = arith.constant dense<0.000000e+00> : vector<4x128xf32>
    %428 = tpu.matmul %426, %250, %cst_90 {dimension_numbers = #tpu.dot_dimension_numbers<[1], [0], [0], [1], [0, 0, 1, 1], [], []>} : vector<4x32xf32>, vector<32x128xf32>, vector<4x128xf32> -> vector<4x128xf32>
    %429 = arith.addf %427, %428 : vector<4x128xf32>
    %430 = vector.extract_strided_slice %429 {offsets = [0, 0], sizes = [4, 32], strides = [1, 1]} : vector<4x128xf32> to vector<4x32xf32>
    %431 = arith.negf %430 : vector<4x32xf32>
    %432 = math.exp %431 : vector<4x32xf32>
    %cst_91 = arith.constant 1.000000e+00 : f32
    %433 = vector.broadcast %cst_91 : f32 to vector<4x32xf32>
    %434 = arith.addf %433, %432 : vector<4x32xf32>
    %435 = arith.divf %433, %434 : vector<4x32xf32>
    %436 = vector.extract_strided_slice %429 {offsets = [0, 32], sizes = [4, 32], strides = [1, 1]} : vector<4x128xf32> to vector<4x32xf32>
    %437 = arith.negf %436 : vector<4x32xf32>
    %438 = math.exp %437 : vector<4x32xf32>
    %cst_92 = arith.constant 1.000000e+00 : f32
    %439 = vector.broadcast %cst_92 : f32 to vector<4x32xf32>
    %440 = arith.addf %439, %438 : vector<4x32xf32>
    %441 = arith.divf %439, %440 : vector<4x32xf32>
    %442 = vector.extract_strided_slice %429 {offsets = [0, 64], sizes = [4, 32], strides = [1, 1]} : vector<4x128xf32> to vector<4x32xf32>
    %443 = math.tanh %442 : vector<4x32xf32>
    %444 = vector.extract_strided_slice %429 {offsets = [0, 96], sizes = [4, 32], strides = [1, 1]} : vector<4x128xf32> to vector<4x32xf32>
    %445 = arith.negf %444 : vector<4x32xf32>
    %446 = math.exp %445 : vector<4x32xf32>
    %cst_93 = arith.constant 1.000000e+00 : f32
    %447 = vector.broadcast %cst_93 : f32 to vector<4x32xf32>
    %448 = arith.addf %447, %446 : vector<4x32xf32>
    %449 = arith.divf %447, %448 : vector<4x32xf32>
    %450 = arith.mulf %441, %424 : vector<4x32xf32>
    %451 = arith.mulf %435, %443 : vector<4x32xf32>
    %452 = arith.addf %450, %451 : vector<4x32xf32>
    %453 = math.tanh %452 : vector<4x32xf32>
    %454 = arith.mulf %449, %453 : vector<4x32xf32>
    %455 = vector.extract_strided_slice %254 {offsets = [28, 0], sizes = [4, 128], strides = [1, 1]} : vector<32x128xf32> to vector<4x128xf32>
    %cst_94 = arith.constant dense<0.000000e+00> : vector<4x128xf32>
    %456 = tpu.matmul %454, %250, %cst_94 {dimension_numbers = #tpu.dot_dimension_numbers<[1], [0], [0], [1], [0, 0, 1, 1], [], []>} : vector<4x32xf32>, vector<32x128xf32>, vector<4x128xf32> -> vector<4x128xf32>
    %457 = arith.addf %455, %456 : vector<4x128xf32>
    %458 = vector.extract_strided_slice %457 {offsets = [0, 0], sizes = [4, 32], strides = [1, 1]} : vector<4x128xf32> to vector<4x32xf32>
    %459 = arith.negf %458 : vector<4x32xf32>
    %460 = math.exp %459 : vector<4x32xf32>
    %cst_95 = arith.constant 1.000000e+00 : f32
    %461 = vector.broadcast %cst_95 : f32 to vector<4x32xf32>
    %462 = arith.addf %461, %460 : vector<4x32xf32>
    %463 = arith.divf %461, %462 : vector<4x32xf32>
    %464 = vector.extract_strided_slice %457 {offsets = [0, 32], sizes = [4, 32], strides = [1, 1]} : vector<4x128xf32> to vector<4x32xf32>
    %465 = arith.negf %464 : vector<4x32xf32>
    %466 = math.exp %465 : vector<4x32xf32>
    %cst_96 = arith.constant 1.000000e+00 : f32
    %467 = vector.broadcast %cst_96 : f32 to vector<4x32xf32>
    %468 = arith.addf %467, %466 : vector<4x32xf32>
    %469 = arith.divf %467, %468 : vector<4x32xf32>
    %470 = vector.extract_strided_slice %457 {offsets = [0, 64], sizes = [4, 32], strides = [1, 1]} : vector<4x128xf32> to vector<4x32xf32>
    %471 = math.tanh %470 : vector<4x32xf32>
    %472 = vector.extract_strided_slice %457 {offsets = [0, 96], sizes = [4, 32], strides = [1, 1]} : vector<4x128xf32> to vector<4x32xf32>
    %473 = arith.negf %472 : vector<4x32xf32>
    %474 = math.exp %473 : vector<4x32xf32>
    %cst_97 = arith.constant 1.000000e+00 : f32
    %475 = vector.broadcast %cst_97 : f32 to vector<4x32xf32>
    %476 = arith.addf %475, %474 : vector<4x32xf32>
    %477 = arith.divf %475, %476 : vector<4x32xf32>
    %478 = arith.mulf %469, %452 : vector<4x32xf32>
    %479 = arith.mulf %463, %471 : vector<4x32xf32>
    %480 = arith.addf %478, %479 : vector<4x32xf32>
    %481 = math.tanh %480 : vector<4x32xf32>
    %482 = arith.mulf %477, %481 : vector<4x32xf32>
    %c1_98 = arith.constant 1 : index
    %c0_99 = arith.constant 0 : index
    %c0_100 = arith.constant 0 : index
    %483 = vector.load %arg16[%c1_98, %c0_99, %c0_100] : memref<2x4x32xf32, #tpu.memory_space<vmem>>, vector<1x4x32xf32>
    %484 = vector.shape_cast %483 : vector<1x4x32xf32> to vector<4x32xf32>
    %485 = vector.shape_cast %482 : vector<4x32xf32> to vector<1x4x32xf32>
    tpu.vector_store %arg16[%c1_98, %c0_99, %c0_100], %485 {strides = array<i32>} : memref<2x4x32xf32, #tpu.memory_space<vmem>>, vector<1x4x32xf32>,
    %c1_101 = arith.constant 1 : index
    %c0_102 = arith.constant 0 : index
    %c0_103 = arith.constant 0 : index
    %486 = vector.load %arg17[%c1_101, %c0_102, %c0_103] : memref<2x4x32xf32, #tpu.memory_space<vmem>>, vector<1x4x32xf32>
    %487 = vector.shape_cast %486 : vector<1x4x32xf32> to vector<4x32xf32>
    %488 = vector.shape_cast %480 : vector<4x32xf32> to vector<1x4x32xf32>
    tpu.vector_store %arg17[%c1_101, %c0_102, %c0_103], %488 {strides = array<i32>} : memref<2x4x32xf32, #tpu.memory_space<vmem>>, vector<1x4x32xf32>,
    %489 = tpu.concatenate %286, %314, %342, %370, %398, %426, %454, %482 in 0 : vector<4x32xf32>, vector<4x32xf32>, vector<4x32xf32>, vector<4x32xf32>, vector<4x32xf32>, vector<4x32xf32>, vector<4x32xf32>, vector<4x32xf32> -> vector<32x32xf32>
    %c0_104 = arith.constant 0 : index
    %c0_105 = arith.constant 0 : index
    %490 = vector.load %arg12[%c0_104, %c0_105] : memref<32x256xf32, #tpu.memory_space<vmem>>, vector<32x256xf32>
    %cst_106 = arith.constant dense<0.000000e+00> : vector<32x256xf32>
    %491 = tpu.matmul %489, %490, %cst_106 {dimension_numbers = #tpu.dot_dimension_numbers<[1], [0], [0], [1], [0, 0, 1, 1], [], []>} : vector<32x32xf32>, vector<32x256xf32>, vector<32x256xf32> -> vector<32x256xf32>
    %c0_107 = arith.constant 0 : index
    %c0_108 = arith.constant 0 : index
    %492 = vector.load %arg5[%c0_107, %c0_108] : memref<32x16xf32, #tpu.memory_space<vmem>>, vector<32x16xf32>
    %c0_109 = arith.constant 0 : index
    %c0_110 = arith.constant 0 : index
    %493 = vector.load %arg13[%c0_109, %c0_110] : memref<16x256xf32, #tpu.memory_space<vmem>>, vector<16x256xf32>
    %cst_111 = arith.constant dense<0.000000e+00> : vector<32x256xf32>
    %494 = tpu.matmul %492, %493, %cst_111 {dimension_numbers = #tpu.dot_dimension_numbers<[1], [0], [0], [1], [0, 0, 1, 1], [], []>} : vector<32x16xf32>, vector<16x256xf32>, vector<32x256xf32> -> vector<32x256xf32>
    %495 = arith.addf %491, %494 : vector<32x256xf32>
    %c0_112 = arith.constant 0 : index
    %c0_113 = arith.constant 0 : index
    %496 = vector.load %arg14[%c0_112, %c0_113] : memref<1x256xf32, #tpu.memory_space<vmem>>, vector<1x256xf32>
    %497 = vector.broadcast %496 : vector<1x256xf32> to vector<32x256xf32>
    %498 = arith.addf %495, %497 : vector<32x256xf32>
    %cst_114 = arith.constant dense<0xFF800000> : vector<32xf32>
    %499 = vector.multi_reduction <maximumf>, %498, %cst_114 [1] : vector<32x256xf32> to vector<32xf32>
    %500 = vector.shape_cast %499 : vector<32xf32> to vector<32x1xf32>
    %501 = vector.broadcast %500 : vector<32x1xf32> to vector<32x256xf32>
    %502 = arith.subf %498, %501 : vector<32x256xf32>
    %503 = math.exp %502 : vector<32x256xf32>
    %cst_115 = arith.constant dense<0.000000e+00> : vector<32xf32>
    %504 = vector.multi_reduction <add>, %503, %cst_115 [1] : vector<32x256xf32> to vector<32xf32>
    %505 = vector.shape_cast %504 : vector<32xf32> to vector<32x1xf32>
    %506 = math.log %505 : vector<32x1xf32>
    %507 = vector.broadcast %506 : vector<32x1xf32> to vector<32x256xf32>
    %508 = arith.subf %502, %507 : vector<32x256xf32>
    %c0_116 = arith.constant 0 : index
    %c0_117 = arith.constant 0 : index
    %509 = vector.load %arg15[%c0_116, %c0_117] : memref<32x256xf32, #tpu.memory_space<vmem>>, vector<32x256xf32>
    tpu.vector_store %arg15[%c0_116, %c0_117], %508 {strides = array<i32>} : memref<32x256xf32, #tpu.memory_space<vmem>>, vector<32x256xf32>,
    return
  }
  func.func @transform_0(%arg0: i32) -> (i32, i32) {
    %c0_i32 = arith.constant 0 : i32
    %c0_i32_0 = arith.constant 0 : i32
    %c0_i32_1 = arith.constant 0 : i32
    return %c0_i32, %c0_i32_0 : i32, i32
  }
  func.func @transform_1(%arg0: i32) -> (i32, i32) {
    %c0_i32 = arith.constant 0 : i32
    %c0_i32_0 = arith.constant 0 : i32
    %c0_i32_1 = arith.constant 0 : i32
    return %c0_i32, %c0_i32_0 : i32, i32
  }
  func.func @transform_2(%arg0: i32) -> (i32, i32, i32) {
    %c0_i32 = arith.constant 0 : i32
    %c0_i32_0 = arith.constant 0 : i32
    %c0_i32_1 = arith.constant 0 : i32
    %c0_i32_2 = arith.constant 0 : i32
    return %c0_i32, %c0_i32_0, %c0_i32_1 : i32, i32, i32
  }
  func.func @transform_3(%arg0: i32) -> (i32, i32, i32) {
    %c0_i32 = arith.constant 0 : i32
    %c0_i32_0 = arith.constant 0 : i32
    %c0_i32_1 = arith.constant 0 : i32
    %c0_i32_2 = arith.constant 0 : i32
    return %c0_i32, %c0_i32_0, %c0_i32_1 : i32, i32, i32
  }
  func.func @transform_4(%arg0: i32) -> (i32, i32) {
    %c0_i32 = arith.constant 0 : i32
    %c0_i32_0 = arith.constant 0 : i32
    %c0_i32_1 = arith.constant 0 : i32
    return %c0_i32, %c0_i32_0 : i32, i32
  }
  func.func @transform_5(%arg0: i32) -> (i32, i32) {
    %c0_i32 = arith.constant 0 : i32
    %c0_i32_0 = arith.constant 0 : i32
    %c0_i32_1 = arith.constant 0 : i32
    return %c0_i32, %c0_i32_0 : i32, i32
  }
  func.func @transform_6(%arg0: i32) -> (i32, i32) {
    %c0_i32 = arith.constant 0 : i32
    %c0_i32_0 = arith.constant 0 : i32
    %c0_i32_1 = arith.constant 0 : i32
    return %c0_i32, %c0_i32_0 : i32, i32
  }
  func.func @transform_7(%arg0: i32) -> (i32, i32) {
    %c0_i32 = arith.constant 0 : i32
    %c0_i32_0 = arith.constant 0 : i32
    %c0_i32_1 = arith.constant 0 : i32
    return %c0_i32, %c0_i32_0 : i32, i32
  }
  func.func @transform_8(%arg0: i32) -> (i32, i32) {
    %c0_i32 = arith.constant 0 : i32
    %c0_i32_0 = arith.constant 0 : i32
    %c0_i32_1 = arith.constant 0 : i32
    return %c0_i32, %c0_i32_0 : i32, i32
  }
  func.func @transform_9(%arg0: i32) -> (i32, i32) {
    %c0_i32 = arith.constant 0 : i32
    %c0_i32_0 = arith.constant 0 : i32
    %c0_i32_1 = arith.constant 0 : i32
    return %c0_i32, %c0_i32_0 : i32, i32
  }
  func.func @transform_10(%arg0: i32) -> (i32, i32) {
    %c0_i32 = arith.constant 0 : i32
    %c0_i32_0 = arith.constant 0 : i32
    %c0_i32_1 = arith.constant 0 : i32
    return %c0_i32, %c0_i32_0 : i32, i32
  }
  func.func @transform_11(%arg0: i32) -> (i32, i32) {
    %c0_i32 = arith.constant 0 : i32
    %c0_i32_0 = arith.constant 0 : i32
    %c0_i32_1 = arith.constant 0 : i32
    return %c0_i32, %c0_i32_0 : i32, i32
  }
  func.func @transform_12(%arg0: i32) -> (i32, i32) {
    %c0_i32 = arith.constant 0 : i32
    %c0_i32_0 = arith.constant 0 : i32
    %c0_i32_1 = arith.constant 0 : i32
    return %c0_i32, %c0_i32_0 : i32, i32
  }
  func.func @transform_13(%arg0: i32) -> (i32, i32) {
    %c0_i32 = arith.constant 0 : i32
    %c0_i32_0 = arith.constant 0 : i32
    %c0_i32_1 = arith.constant 0 : i32
    return %c0_i32, %c0_i32_0 : i32, i32
  }
  func.func @transform_14(%arg0: i32) -> (i32, i32) {
    %c0_i32 = arith.constant 0 : i32
    %c0_i32_0 = arith.constant 0 : i32
    %c0_i32_1 = arith.constant 0 : i32
    return %c0_i32, %c0_i32_0 : i32, i32
  }
  func.func @transform_15(%arg0: i32) -> (i32, i32, i32) {
    %c0_i32 = arith.constant 0 : i32
    %c0_i32_0 = arith.constant 0 : i32
    %c0_i32_1 = arith.constant 0 : i32
    %c0_i32_2 = arith.constant 0 : i32
    return %c0_i32, %c0_i32_0, %c0_i32_1 : i32, i32, i32
  }
  func.func @transform_16(%arg0: i32) -> (i32, i32, i32) {
    %c0_i32 = arith.constant 0 : i32
    %c0_i32_0 = arith.constant 0 : i32
    %c0_i32_1 = arith.constant 0 : i32
    %c0_i32_2 = arith.constant 0 : i32
    return %c0_i32, %c0_i32_0, %c0_i32_1 : i32, i32, i32
  }
}

</mosaic_0001>

<llo_original>
// kernel: output_enhanced_lm_forward.1
$region0: #{output_enhanced_lm_forward.1}
  #allocation0 [shape = 'u32[]', space=smem, size = 0x4, offset = 0x4, fixed_abs, tag = 'smem constant byte address 0x4 - core index']
  #allocation1 [shape = 'u32[72,128]{1,0:T(1,128)}', space=vmem, size = 0x9000, scoped, tag = 'internal scratch']
  %s0 = inlined_call_operand.vmem [shape: s32[32,1], index: 0, kind: input, shape index: {}]
  %s1 = inlined_call_operand.vmem [shape: f32[256,32], index: 1, kind: input, shape index: {}]
  %s2 = inlined_call_operand.vmem [shape: f32[2,4,32], index: 2, kind: input, shape index: {}]
  %s3 = inlined_call_operand.vmem [shape: f32[2,4,32], index: 3, kind: input, shape index: {}]
  %s4 = inlined_call_operand.vmem [shape: f32[32,16], index: 4, kind: input, shape index: {}]
  %s5 = inlined_call_operand.vmem [shape: f32[32,128], index: 5, kind: input, shape index: {}]
  %s6 = inlined_call_operand.vmem [shape: f32[32,128], index: 6, kind: input, shape index: {}]
  %s7 = inlined_call_operand.vmem [shape: f32[1,128], index: 7, kind: input, shape index: {}]
  %s8 = inlined_call_operand.vmem [shape: f32[32,128], index: 8, kind: input, shape index: {}]
  %s9 = inlined_call_operand.vmem [shape: f32[32,128], index: 9, kind: input, shape index: {}]
  %s10 = inlined_call_operand.vmem [shape: f32[1,128], index: 10, kind: input, shape index: {}]
  %s11 = inlined_call_operand.vmem [shape: f32[32,256], index: 11, kind: input, shape index: {}]
  %s12 = inlined_call_operand.vmem [shape: f32[16,256], index: 12, kind: input, shape index: {}]
  %s13 = inlined_call_operand.vmem [shape: f32[1,256], index: 13, kind: input, shape index: {}]
  %s14 = inlined_call_operand.vmem [shape: f32[32,256], index: 14, kind: output, shape index: {0}]
  %s15 = inlined_call_operand.hbm [shape: f32[2,4,32], index: 15, kind: output, shape index: {1}]
  %s16 = inlined_call_operand.hbm [shape: f32[2,4,32], index: 16, kind: output, shape index: {2}]
  %17 = xla_tuple %s14, %s15, %s16
  %s18 = sld [smem:[#allocation0]]
  $region82: #{output_enhanced_lm_forward.1} parent=0
    _
  %s20 = ssub.s32 1, %s18
  %s21 = scalar_select 0, %s20, %s18
  $region1: #{output_enhanced_lm_forward.1} parent=0
    #allocation2 [shape = 'u8[4096]{0}', space=vmem, size = 0x1000, scoped, tag = 'output window, operand 1, single buffered']
    #allocation3 [shape = 's32[1]{0}', space=sflag, size = 0x4, scoped, tag = 'scoped memory for output_enhanced_lm_forward.1']
    #allocation4 [shape = 'u8[4096]{0}', space=vmem, size = 0x1000, scoped, tag = 'output window, operand 2, single buffered']
    #allocation5 [shape = 's32[1]{0}', space=sflag, size = 0x4, scoped, tag = 'scoped memory for output_enhanced_lm_forward.1']
    %22 = vsyncpa [#allocation3], 0
    %23 = vsyncpa [#allocation5], 0
    // Predicated region
    $region2: #{output_enhanced_lm_forward.1} parent=1 // pred_check
      _
    $region3: #{output_enhanced_lm_forward.1} parent=1 // pred_check_branch
      %25 = sbr.rel (0) target = $region5
    $region4: #{output_enhanced_lm_forward.1} parent=1 // pred_region
      _
    $region5: #{output_enhanced_lm_forward.1} parent=1 // pred_fallthru
      _
    // Predicated region
    $region6: #{output_enhanced_lm_forward.1} parent=1 // pred_check
      _
    $region7: #{output_enhanced_lm_forward.1} parent=1 // pred_check_branch
      %27 = sbr.rel (0) target = $region9
    $region8: #{output_enhanced_lm_forward.1} parent=1 // pred_region
      _
    $region9: #{output_enhanced_lm_forward.1} parent=1 // pred_fallthru
      _
    // Predicated region
    $region10: #{output_enhanced_lm_forward.1} parent=1 // pred_check
      _
    $region11: #{output_enhanced_lm_forward.1} parent=1 // pred_check_branch
      %29 = sbr.rel (0) target = $region13
    $region12: #{output_enhanced_lm_forward.1} parent=1 // pred_region
      _
    $region13: #{output_enhanced_lm_forward.1} parent=1 // pred_fallthru
      _
    // Predicated region
    $region14: #{output_enhanced_lm_forward.1} parent=1 // pred_check
      _
    $region15: #{output_enhanced_lm_forward.1} parent=1 // pred_check_branch
      %31 = sbr.rel (0) target = $region17
    $region16: #{output_enhanced_lm_forward.1} parent=1 // pred_region
      _
    $region17: #{output_enhanced_lm_forward.1} parent=1 // pred_fallthru
      _
    // Predicated region
    $region18: #{output_enhanced_lm_forward.1} parent=1 // pred_check
      _
    $region19: #{output_enhanced_lm_forward.1} parent=1 // pred_check_branch
      %33 = sbr.rel (0) target = $region21
    $region20: #{output_enhanced_lm_forward.1} parent=1 // pred_region
      _
    $region21: #{output_enhanced_lm_forward.1} parent=1 // pred_fallthru
      _
    // Predicated region
    $region22: #{output_enhanced_lm_forward.1} parent=1 // pred_check
      _
    $region23: #{output_enhanced_lm_forward.1} parent=1 // pred_check_branch
      %35 = sbr.rel (0) target = $region25
    $region24: #{output_enhanced_lm_forward.1} parent=1 // pred_region
      _
    $region25: #{output_enhanced_lm_forward.1} parent=1 // pred_fallthru
      _
    // Predicated region
    $region26: #{output_enhanced_lm_forward.1} parent=1 // pred_check
      _
    $region27: #{output_enhanced_lm_forward.1} parent=1 // pred_check_branch
      %37 = sbr.rel (0) target = $region29
    $region28: #{output_enhanced_lm_forward.1} parent=1 // pred_region
      _
    $region29: #{output_enhanced_lm_forward.1} parent=1 // pred_fallthru
      _
    // Predicated region
    $region30: #{output_enhanced_lm_forward.1} parent=1 // pred_check
      _
    $region31: #{output_enhanced_lm_forward.1} parent=1 // pred_check_branch
      %39 = sbr.rel (0) target = $region33
    $region32: #{output_enhanced_lm_forward.1} parent=1 // pred_region
      _
    $region33: #{output_enhanced_lm_forward.1} parent=1 // pred_fallthru
      _
    // Predicated region
    $region34: #{output_enhanced_lm_forward.1} parent=1 // pred_check
      _
    $region35: #{output_enhanced_lm_forward.1} parent=1 // pred_check_branch
      %41 = sbr.rel (0) target = $region37
    $region36: #{output_enhanced_lm_forward.1} parent=1 // pred_region
      _
    $region37: #{output_enhanced_lm_forward.1} parent=1 // pred_fallthru
      _
    // Predicated region
    $region38: #{output_enhanced_lm_forward.1} parent=1 // pred_check
      _
    $region39: #{output_enhanced_lm_forward.1} parent=1 // pred_check_branch
      %43 = sbr.rel (0) target = $region41
    $region40: #{output_enhanced_lm_forward.1} parent=1 // pred_region
      _
    $region41: #{output_enhanced_lm_forward.1} parent=1 // pred_fallthru
      _
    // Predicated region
    $region42: #{output_enhanced_lm_forward.1} parent=1 // pred_check
      _
    $region43: #{output_enhanced_lm_forward.1} parent=1 // pred_check_branch
      %45 = sbr.rel (0) target = $region45
    $region44: #{output_enhanced_lm_forward.1} parent=1 // pred_region
      _
    $region45: #{output_enhanced_lm_forward.1} parent=1 // pred_fallthru
      _
    // Predicated region
    $region46: #{output_enhanced_lm_forward.1} parent=1 // pred_check
      _
    $region47: #{output_enhanced_lm_forward.1} parent=1 // pred_check_branch
      %47 = sbr.rel (0) target = $region49
    $region48: #{output_enhanced_lm_forward.1} parent=1 // pred_region
      _
    $region49: #{output_enhanced_lm_forward.1} parent=1 // pred_fallthru
      _
    // Predicated region
    $region50: #{output_enhanced_lm_forward.1} parent=1 // pred_check
      _
    $region51: #{output_enhanced_lm_forward.1} parent=1 // pred_check_branch
      %49 = sbr.rel (0) target = $region53
    $region52: #{output_enhanced_lm_forward.1} parent=1 // pred_region
      _
    $region53: #{output_enhanced_lm_forward.1} parent=1 // pred_fallthru
      _
    // Predicated region
    $region54: #{output_enhanced_lm_forward.1} parent=1 // pred_check
      _
    $region55: #{output_enhanced_lm_forward.1} parent=1 // pred_check_branch
      %51 = sbr.rel (0) target = $region57
    $region56: #{output_enhanced_lm_forward.1} parent=1 // pred_region
      _
    $region57: #{output_enhanced_lm_forward.1} parent=1 // pred_fallthru
      _
    %v52 = vld [vmem:[%s0] sm:$0xff]
    %v53 = vld [vmem:[%s0 + $0x8] sm:$0xff]
    %v54 = vld [vmem:[%s0 + $0x10] sm:$0xff]
    %v55 = vld [vmem:[%s0 + $0x18] sm:$0xff]
    %v56 = vlaneseq
    %v57 = vand.u32 %v56, 127
    %v58 = vadd.s32 %v57, 128
    %59 = vset.pattern.permute.xlu0 0
    %60 = vperm.xlu0 %59, %v52
    %v61 = vpop.permute.xlu0 %60
    %62 = vset.pattern.permute.xlu0 0
    %63 = vperm.xlu0 %62, %v53
    %v64 = vpop.permute.xlu0 %63
    %65 = vset.pattern.permute.xlu0 0
    %66 = vperm.xlu0 %65, %v54
    %v67 = vpop.permute.xlu0 %66
    %68 = vset.pattern.permute.xlu0 0
    %69 = vperm.xlu0 %68, %v55
    %v70 = vpop.permute.xlu0 %69
    %vm71 = vcmp.eq.s32.totalorder %v57, %v61
    %vm72 = vcmp.eq.s32.totalorder %v58, %v61
    %vm73 = vcmp.eq.s32.totalorder %v57, %v64
    %vm74 = vcmp.eq.s32.totalorder %v58, %v64
    %vm75 = vcmp.eq.s32.totalorder %v57, %v67
    %vm76 = vcmp.eq.s32.totalorder %v58, %v67
    %vm77 = vcmp.eq.s32.totalorder %v57, %v70
    %vm78 = vcmp.eq.s32.totalorder %v58, %v70
    %v79 = vsel %vm71, 1, 0
    %v80 = vsel %vm72, 1, 0
    %v81 = vsel %vm73, 1, 0
    %v82 = vsel %vm74, 1, 0
    %v83 = vsel %vm75, 1, 0
    %v84 = vsel %vm76, 1, 0
    %v85 = vsel %vm77, 1, 0
    %v86 = vsel %vm78, 1, 0
    %v87 = vcvt.s32.f32 %v79
    %v88 = vcvt.s32.f32 %v80
    %v89 = vcvt.s32.f32 %v81
    %v90 = vcvt.s32.f32 %v82
    %v91 = vcvt.s32.f32 %v83
    %v92 = vcvt.s32.f32 %v84
    %v93 = vcvt.s32.f32 %v85
    %v94 = vcvt.s32.f32 %v86
    %v95 = vld [vmem:[%s1] sm:$0xff]
    %v96 = vld [vmem:[%s1 + $0x8] sm:$0xff]
    %v97 = vld [vmem:[%s1 + $0x10] sm:$0xff]
    %v98 = vld [vmem:[%s1 + $0x18] sm:$0xff]
    %v99 = vld [vmem:[%s1 + $0x20] sm:$0xff]
    %v100 = vld [vmem:[%s1 + $0x28] sm:$0xff]
    %v101 = vld [vmem:[%s1 + $0x30] sm:$0xff]
    %v102 = vld [vmem:[%s1 + $0x38] sm:$0xff]
    %v103 = vld [vmem:[%s1 + $0x40] sm:$0xff]
    %v104 = vld [vmem:[%s1 + $0x48] sm:$0xff]
    %v105 = vld [vmem:[%s1 + $0x50] sm:$0xff]
    %v106 = vld [vmem:[%s1 + $0x58] sm:$0xff]
    %v107 = vld [vmem:[%s1 + $0x60] sm:$0xff]
    %v108 = vld [vmem:[%s1 + $0x68] sm:$0xff]
    %v109 = vld [vmem:[%s1 + $0x70] sm:$0xff]
    %v110 = vld [vmem:[%s1 + $0x78] sm:$0xff]
    %v111 = vld [vmem:[%s1 + $0x80] sm:$0xff]
    %v112 = vld [vmem:[%s1 + $0x88] sm:$0xff]
    %v113 = vld [vmem:[%s1 + $0x90] sm:$0xff]
    %v114 = vld [vmem:[%s1 + $0x98] sm:$0xff]
    %v115 = vld [vmem:[%s1 + $0xa0] sm:$0xff]
    %v116 = vld [vmem:[%s1 + $0xa8] sm:$0xff]
    %v117 = vld [vmem:[%s1 + $0xb0] sm:$0xff]
    %v118 = vld [vmem:[%s1 + $0xb8] sm:$0xff]
    %v119 = vld [vmem:[%s1 + $0xc0] sm:$0xff]
    %v120 = vld [vmem:[%s1 + $0xc8] sm:$0xff]
    %v121 = vld [vmem:[%s1 + $0xd0] sm:$0xff]
    %v122 = vld [vmem:[%s1 + $0xd8] sm:$0xff]
    %v123 = vld [vmem:[%s1 + $0xe0] sm:$0xff]
    %v124 = vld [vmem:[%s1 + $0xe8] sm:$0xff]
    %v125 = vld [vmem:[%s1 + $0xf0] sm:$0xff]
    %v126 = vld [vmem:[%s1 + $0xf8] sm:$0xff]
    %127 = vmatpush.msra.mxu0 %v110
    %128 = vmatpush.msra.mxu0 %v109
    %129 = vmatpush.msra.mxu0 %v108
    %130 = vmatpush.msra.mxu0 %v107
    %131 = vmatpush.msra.mxu0 %v106
    %132 = vmatpush.msra.mxu0 %v105
    %133 = vmatpush.msra.mxu0 %v104
    %134 = vmatpush.msra.mxu0 %v103
    %135 = vmatpush.msra.mxu0 %v102
    %136 = vmatpush.msra.mxu0 %v101
    %137 = vmatpush.msra.mxu0 %v100
    %138 = vmatpush.msra.mxu0 %v99
    %139 = vmatpush.msra.mxu0 %v98
    %140 = vmatpush.msra.mxu0 %v97
    %141 = vmatpush.msra.mxu0 %v96
    %142 = vmatpush.msra.mxu0 %v95
    %143 = vmatmul.f32.gmra.mxu0 %v87
    %v144 = vpop.f32.mrf.mxu0
    %v145 = vadd.f32 0.0, %v144
    %146 = vmatmul.f32.gmra.mxu0 %v89
    %v147 = vpop.f32.mrf.mxu0
    %v148 = vadd.f32 0.0, %v147
    %149 = vmatmul.f32.gmra.mxu0 %v91
    %v150 = vpop.f32.mrf.mxu0
    %v151 = vadd.f32 0.0, %v150
    %152 = vmatmul.f32.gmra.mxu0 %v93
    %v153 = vpop.f32.mrf.mxu0
    %v154 = vadd.f32 0.0, %v153
    %155 = vdwg.mxu0
    %156 = vmatpush.msra.mxu0 %v126
    %157 = vmatpush.msra.mxu0 %v125
    %158 = vmatpush.msra.mxu0 %v124
    %159 = vmatpush.msra.mxu0 %v123
    %160 = vmatpush.msra.mxu0 %v122
    %161 = vmatpush.msra.mxu0 %v121
    %162 = vmatpush.msra.mxu0 %v120
    %163 = vmatpush.msra.mxu0 %v119
    %164 = vmatpush.msra.mxu0 %v118
    %165 = vmatpush.msra.mxu0 %v117
    %166 = vmatpush.msra.mxu0 %v116
    %167 = vmatpush.msra.mxu0 %v115
    %168 = vmatpush.msra.mxu0 %v114
    %169 = vmatpush.msra.mxu0 %v113
    %170 = vmatpush.msra.mxu0 %v112
    %171 = vmatpush.msra.mxu0 %v111
    %172 = vmatmul.f32.gmra.mxu0 %v88
    %v173 = vpop.f32.mrf.mxu0
    %v174 = vadd.f32 %v145, %v173
    %175 = vmatmul.f32.gmra.mxu0 %v90
    %v176 = vpop.f32.mrf.mxu0
    %v177 = vadd.f32 %v148, %v176
    %178 = vmatmul.f32.gmra.mxu0 %v92
    %v179 = vpop.f32.mrf.mxu0
    %v180 = vadd.f32 %v151, %v179
    %181 = vmatmul.f32.gmra.mxu0 %v94
    %v182 = vpop.f32.mrf.mxu0
    %v183 = vadd.f32 %v154, %v182
    %184 = vdwg.mxu0
    %v185 = vld [vmem:[%s5] sm:$0xff]
    %v186 = vld [vmem:[%s5 + $0x8] sm:$0xff]
    %v187 = vld [vmem:[%s5 + $0x10] sm:$0xff]
    %v188 = vld [vmem:[%s5 + $0x18] sm:$0xff]
    %v189 = vld [vmem:[%s6] sm:$0xff]
    %v190 = vld [vmem:[%s6 + $0x8] sm:$0xff]
    %v191 = vld [vmem:[%s6 + $0x10] sm:$0xff]
    %v192 = vld [vmem:[%s6 + $0x18] sm:$0xff]
    %v193 = vld [vmem:[%s7] sm:$0x1]
    %v195 = vperm.slane %v193, 0
    %vm197 = vcmask 261120
    %v199 = vsel %vm197, %v174, 0
    %v202 = vsel %vm197, %v177, 0
    %v205 = vsel %vm197, %v180, 0
    %v208 = vsel %vm197, %v183, 0
    %210 = vmatpush.msra.mxu0 0.0
    %211 = vmatpush.msra.mxu0 0.0
    %212 = vmatpush.msra.mxu0 0.0
    %213 = vmatpush.msra.mxu0 0.0
    %214 = vmatpush.msra.mxu0 0.0
    %215 = vmatpush.msra.mxu0 0.0
    %216 = vmatpush.msra.mxu0 0.0
    %217 = vmatpush.msra.mxu0 0.0
    %218 = vmatpush.msra.mxu0 0.0
    %219 = vmatpush.msra.mxu0 0.0
    %220 = vmatpush.msra.mxu0 0.0
    %221 = vmatpush.msra.mxu0 0.0
    %222 = vmatpush.msra.mxu0 %v188
    %223 = vmatpush.msra.mxu0 %v187
    %224 = vmatpush.msra.mxu0 %v186
    %225 = vmatpush.msra.mxu0 %v185
    %226 = vmatmul.f32.gmra.mxu0 %v199
    %v227 = vpop.f32.mrf.mxu0
    %v228 = vadd.f32 %v195, %v227
    %229 = vmatmul.f32.gmra.mxu0 %v202
    %v230 = vpop.f32.mrf.mxu0
    %v231 = vadd.f32 %v195, %v230
    %232 = vmatmul.f32.gmra.mxu0 %v205
    %v233 = vpop.f32.mrf.mxu0
    %v234 = vadd.f32 %v195, %v233
    %235 = vmatmul.f32.gmra.mxu0 %v208
    %v236 = vpop.f32.mrf.mxu0
    %v237 = vadd.f32 %v195, %v236
    %238 = vdwg.mxu0
    %v239 = vld [vmem:[%s2] sm:$0xf]
    %v240 = vld [vmem:[%s3] sm:$0xf]
    %v242 = vsel %vm197, %v239, 0
    %244 = vmatpush.msra.mxu0 0.0
    %245 = vmatpush.msra.mxu0 0.0
    %246 = vmatpush.msra.mxu0 0.0
    %247 = vmatpush.msra.mxu0 0.0
    %248 = vmatpush.msra.mxu0 0.0
    %249 = vmatpush.msra.mxu0 0.0
    %250 = vmatpush.msra.mxu0 0.0
    %251 = vmatpush.msra.mxu0 0.0
    %252 = vmatpush.msra.mxu0 0.0
    %253 = vmatpush.msra.mxu0 0.0
    %254 = vmatpush.msra.mxu0 0.0
    %255 = vmatpush.msra.mxu0 0.0
    %256 = vmatpush.msra.mxu0 %v192
    %257 = vmatpush.msra.mxu0 %v191
    %258 = vmatpush.msra.mxu0 %v190
    %259 = vmatpush.msra.mxu0 %v189
    %260 = vmatmul.f32.gmra.mxu0 %v242
    %v261 = vpop.f32.mrf.mxu0
    %v262 = vadd.f32 0.0, %v261
    %263 = vdwg.mxu0
    %v264 = vadd.f32 %v228, %v262
    %v265 = vxor.u32 %v264, 2147483648
    %v266 = vmul.f32 %v265, 1.442695
    %v267 = vpow.pop %v266
    %v268 = vadd.f32 %v267, 1.0
    %v269 = vrcp.pop %v268
    %v270 = vmul.f32 %v268, %v269
    %v271 = vsub.f32 1.0, %v270
    %v272 = vmul.f32 %v269, %v271
    %v273 = vadd.f32 %v269, %v272
    %vm274 = vweird.f32 %v268
    %vm275 = vweird.f32 %v269
    %vm276 = vmor %vm274, %vm275
    %v277 = vsel %vm276, %v269, %v273
    %v278 = vand.u32 2147483647, %v268
    %vm279 = vcmp.eq.f32.partialorder %v278, 8.507059e+37
    %v280 = vand.u32 %v268, 2147483648
    %v281 = vor.u32 1.1754944e-38, %v280
    %v282 = vsel %vm279, %v281, %v277
    %v283 = vmul.f32 1.0, %v282
    %v284 = vtanh.pop %v264
    %286 = vrot.lane.b32.xlu0 %v240, 32
    %v287 = vpop.permute.xlu0 %286
    %v289 = vmul.f32 %v283, %v287
    %291 = vrot.lane.b32.xlu0 %v284, 64
    %v292 = vpop.permute.xlu0 %291
    %v294 = vmul.f32 %v283, %v292
    %296 = vrot.lane.b32.xlu0 %v294, 32
    %v297 = vpop.permute.xlu0 %296
    %v299 = vadd.f32 %v289, %v297
    %v300 = vtanh.pop %v299
    %302 = vrot.lane.b32.xlu0 %v300, 64
    %v303 = vpop.permute.xlu0 %302
    %v305 = vmul.f32 %v283, %v303
    %307 = vrot.lane.b32.xlu0 %v305, 32
    %v308 = vpop.permute.xlu0 %307
    %v309 = vsel %vm197, %v308, 0
    %311 = vmatpush.msra.mxu0 0.0
    %312 = vmatpush.msra.mxu0 0.0
    %313 = vmatpush.msra.mxu0 0.0
    %314 = vmatpush.msra.mxu0 0.0
    %315 = vmatpush.msra.mxu0 0.0
    %316 = vmatpush.msra.mxu0 0.0
    %317 = vmatpush.msra.mxu0 0.0
    %318 = vmatpush.msra.mxu0 0.0
    %319 = vmatpush.msra.mxu0 0.0
    %320 = vmatpush.msra.mxu0 0.0
    %321 = vmatpush.msra.mxu0 0.0
    %322 = vmatpush.msra.mxu0 0.0
    %323 = vmatpush.msra.mxu0 %v192
    %324 = vmatpush.msra.mxu0 %v191
    %325 = vmatpush.msra.mxu0 %v190
    %326 = vmatpush.msra.mxu0 %v189
    %327 = vmatmul.f32.gmra.mxu0 %v309
    %v328 = vpop.f32.mrf.mxu0
    %v329 = vadd.f32 0.0, %v328
    %330 = vdwg.mxu0
    %v332 = vrot.slane %v329, 4
    %v334 = vadd.f32 %v228, %v332
    %v335 = vxor.u32 %v334, 2147483648
    %v336 = vmul.f32 %v335, 1.442695
    %v337 = vpow.pop %v336
    %v338 = vadd.f32 %v337, 1.0
    %v339 = vrcp.pop %v338
    %v340 = vmul.f32 %v338, %v339
    %v341 = vsub.f32 1.0, %v340
    %v342 = vmul.f32 %v339, %v341
    %v343 = vadd.f32 %v339, %v342
    %vm344 = vweird.f32 %v338
    %vm345 = vweird.f32 %v339
    %vm346 = vmor %vm344, %vm345
    %v347 = vsel %vm346, %v339, %v343
    %v348 = vand.u32 2147483647, %v338
    %vm349 = vcmp.eq.f32.partialorder %v348, 8.507059e+37
    %v350 = vand.u32 %v338, 2147483648
    %v351 = vor.u32 1.1754944e-38, %v350
    %v352 = vsel %vm349, %v351, %v347
    %v353 = vmul.f32 1.0, %v352
    %v354 = vtanh.pop %v334
    %v356 = vrot.slane %v299, 4
    %v358 = vmul.f32 %v353, %v356
    %360 = vrot.lane.b32.xlu0 %v354, 64
    %v361 = vpop.permute.xlu0 %360
    %v363 = vmul.f32 %v353, %v361
    %365 = vrot.lane.b32.xlu0 %v363, 32
    %v366 = vpop.permute.xlu0 %365
    %v368 = vadd.f32 %v358, %v366
    %v369 = vtanh.pop %v368
    %371 = vrot.lane.b32.xlu0 %v369, 64
    %v372 = vpop.permute.xlu0 %371
    %v374 = vmul.f32 %v353, %v372
    %v376 = vrot.slane %v374, 4
    %377 = vrot.lane.b32.xlu0 %v376, 32
    %v378 = vpop.permute.xlu0 %377
    %v379 = vsel %vm197, %v378, 0
    %381 = vmatpush.msra.mxu0 0.0
    %382 = vmatpush.msra.mxu0 0.0
    %383 = vmatpush.msra.mxu0 0.0
    %384 = vmatpush.msra.mxu0 0.0
    %385 = vmatpush.msra.mxu0 0.0
    %386 = vmatpush.msra.mxu0 0.0
    %387 = vmatpush.msra.mxu0 0.0
    %388 = vmatpush.msra.mxu0 0.0
    %389 = vmatpush.msra.mxu0 0.0
    %390 = vmatpush.msra.mxu0 0.0
    %391 = vmatpush.msra.mxu0 0.0
    %392 = vmatpush.msra.mxu0 0.0
    %393 = vmatpush.msra.mxu0 %v192
    %394 = vmatpush.msra.mxu0 %v191
    %395 = vmatpush.msra.mxu0 %v190
    %396 = vmatpush.msra.mxu0 %v189
    %397 = vmatmul.f32.gmra.mxu0 %v379
    %v398 = vpop.f32.mrf.mxu0
    %v399 = vadd.f32 0.0, %v398
    %400 = vdwg.mxu0
    %v401 = vadd.f32 %v231, %v399
    %v402 = vxor.u32 %v401, 2147483648
    %v403 = vmul.f32 %v402, 1.442695
    %v404 = vpow.pop %v403
    %v405 = vadd.f32 %v404, 1.0
    %v406 = vrcp.pop %v405
    %v407 = vmul.f32 %v405, %v406
    %v408 = vsub.f32 1.0, %v407
    %v409 = vmul.f32 %v406, %v408
    %v410 = vadd.f32 %v406, %v409
    %vm411 = vweird.f32 %v405
    %vm412 = vweird.f32 %v406
    %vm413 = vmor %vm411, %vm412
    %v414 = vsel %vm413, %v406, %v410
    %v415 = vand.u32 2147483647, %v405
    %vm416 = vcmp.eq.f32.partialorder %v415, 8.507059e+37
    %v417 = vand.u32 %v405, 2147483648
    %v418 = vor.u32 1.1754944e-38, %v417
    %v419 = vsel %vm416, %v418, %v414
    %v420 = vmul.f32 1.0, %v419
    %v421 = vtanh.pop %v401
    %v423 = vrot.slane %v368, 4
    %v425 = vmul.f32 %v420, %v423
    %427 = vrot.lane.b32.xlu0 %v421, 64
    %v428 = vpop.permute.xlu0 %427
    %v430 = vmul.f32 %v420, %v428
    %432 = vrot.lane.b32.xlu0 %v430, 32
    %v433 = vpop.permute.xlu0 %432
    %v435 = vadd.f32 %v425, %v433
    %v436 = vtanh.pop %v435
    %438 = vrot.lane.b32.xlu0 %v436, 64
    %v439 = vpop.permute.xlu0 %438
    %v441 = vmul.f32 %v420, %v439
    %443 = vrot.lane.b32.xlu0 %v441, 32
    %v444 = vpop.permute.xlu0 %443
    %v445 = vsel %vm197, %v444, 0
    %447 = vmatpush.msra.mxu0 0.0
    %448 = vmatpush.msra.mxu0 0.0
    %449 = vmatpush.msra.mxu0 0.0
    %450 = vmatpush.msra.mxu0 0.0
    %451 = vmatpush.msra.mxu0 0.0
    %452 = vmatpush.msra.mxu0 0.0
    %453 = vmatpush.msra.mxu0 0.0
    %454 = vmatpush.msra.mxu0 0.0
    %455 = vmatpush.msra.mxu0 0.0
    %456 = vmatpush.msra.mxu0 0.0
    %457 = vmatpush.msra.mxu0 0.0
    %458 = vmatpush.msra.mxu0 0.0
    %459 = vmatpush.msra.mxu0 %v192
    %460 = vmatpush.msra.mxu0 %v191
    %461 = vmatpush.msra.mxu0 %v190
    %462 = vmatpush.msra.mxu0 %v189
    %463 = vmatmul.f32.gmra.mxu0 %v445
    %v464 = vpop.f32.mrf.mxu0
    %v465 = vadd.f32 0.0, %v464
    %466 = vdwg.mxu0
    %v468 = vrot.slane %v465, 4
    %v470 = vadd.f32 %v231, %v468
    %v471 = vxor.u32 %v470, 2147483648
    %v472 = vmul.f32 %v471, 1.442695
    %v473 = vpow.pop %v472
    %v474 = vadd.f32 %v473, 1.0
    %v475 = vrcp.pop %v474
    %v476 = vmul.f32 %v474, %v475
    %v477 = vsub.f32 1.0, %v476
    %v478 = vmul.f32 %v475, %v477
    %v479 = vadd.f32 %v475, %v478
    %vm480 = vweird.f32 %v474
    %vm481 = vweird.f32 %v475
    %vm482 = vmor %vm480, %vm481
    %v483 = vsel %vm482, %v475, %v479
    %v484 = vand.u32 2147483647, %v474
    %vm485 = vcmp.eq.f32.partialorder %v484, 8.507059e+37
    %v486 = vand.u32 %v474, 2147483648
    %v487 = vor.u32 1.1754944e-38, %v486
    %v488 = vsel %vm485, %v487, %v483
    %v489 = vmul.f32 1.0, %v488
    %v490 = vtanh.pop %v470
    %v492 = vrot.slane %v435, 4
    %v494 = vmul.f32 %v489, %v492
    %496 = vrot.lane.b32.xlu0 %v490, 64
    %v497 = vpop.permute.xlu0 %496
    %v499 = vmul.f32 %v489, %v497
    %501 = vrot.lane.b32.xlu0 %v499, 32
    %v502 = vpop.permute.xlu0 %501
    %v504 = vadd.f32 %v494, %v502
    %v505 = vtanh.pop %v504
    %507 = vrot.lane.b32.xlu0 %v505, 64
    %v508 = vpop.permute.xlu0 %507
    %v510 = vmul.f32 %v489, %v508
    %v512 = vrot.slane %v510, 4
    %513 = vrot.lane.b32.xlu0 %v512, 32
    %v514 = vpop.permute.xlu0 %513
    %v515 = vsel %vm197, %v514, 0
    %517 = vmatpush.msra.mxu0 0.0
    %518 = vmatpush.msra.mxu0 0.0
    %519 = vmatpush.msra.mxu0 0.0
    %520 = vmatpush.msra.mxu0 0.0
    %521 = vmatpush.msra.mxu0 0.0
    %522 = vmatpush.msra.mxu0 0.0
    %523 = vmatpush.msra.mxu0 0.0
    %524 = vmatpush.msra.mxu0 0.0
    %525 = vmatpush.msra.mxu0 0.0
    %526 = vmatpush.msra.mxu0 0.0
    %527 = vmatpush.msra.mxu0 0.0
    %528 = vmatpush.msra.mxu0 0.0
    %529 = vmatpush.msra.mxu0 %v192
    %530 = vmatpush.msra.mxu0 %v191
    %531 = vmatpush.msra.mxu0 %v190
    %532 = vmatpush.msra.mxu0 %v189
    %533 = vmatmul.f32.gmra.mxu0 %v515
    %v534 = vpop.f32.mrf.mxu0
    %v535 = vadd.f32 0.0, %v534
    %536 = vdwg.mxu0
    %v537 = vadd.f32 %v234, %v535
    %v538 = vxor.u32 %v537, 2147483648
    %v539 = vmul.f32 %v538, 1.442695
    %v540 = vpow.pop %v539
    %v541 = vadd.f32 %v540, 1.0
    %v542 = vrcp.pop %v541
    %v543 = vmul.f32 %v541, %v542
    %v544 = vsub.f32 1.0, %v543
    %v545 = vmul.f32 %v542, %v544
    %v546 = vadd.f32 %v542, %v545
    %vm547 = vweird.f32 %v541
    %vm548 = vweird.f32 %v542
    %vm549 = vmor %vm547, %vm548
    %v550 = vsel %vm549, %v542, %v546
    %v551 = vand.u32 2147483647, %v541
    %vm552 = vcmp.eq.f32.partialorder %v551, 8.507059e+37
    %v553 = vand.u32 %v541, 2147483648
    %v554 = vor.u32 1.1754944e-38, %v553
    %v555 = vsel %vm552, %v554, %v550
    %v556 = vmul.f32 1.0, %v555
    %v557 = vtanh.pop %v537
    %v559 = vrot.slane %v504, 4
    %v561 = vmul.f32 %v556, %v559
    %563 = vrot.lane.b32.xlu0 %v557, 64
    %v564 = vpop.permute.xlu0 %563
    %v566 = vmul.f32 %v556, %v564
    %568 = vrot.lane.b32.xlu0 %v566, 32
    %v569 = vpop.permute.xlu0 %568
    %v571 = vadd.f32 %v561, %v569
    %v572 = vtanh.pop %v571
    %574 = vrot.lane.b32.xlu0 %v572, 64
    %v575 = vpop.permute.xlu0 %574
    %v577 = vmul.f32 %v556, %v575
    %579 = vrot.lane.b32.xlu0 %v577, 32
    %v580 = vpop.permute.xlu0 %579
    %v581 = vsel %vm197, %v580, 0
    %583 = vmatpush.msra.mxu0 0.0
    %584 = vmatpush.msra.mxu0 0.0
    %585 = vmatpush.msra.mxu0 0.0
    %586 = vmatpush.msra.mxu0 0.0
    %587 = vmatpush.msra.mxu0 0.0
    %588 = vmatpush.msra.mxu0 0.0
    %589 = vmatpush.msra.mxu0 0.0
    %590 = vmatpush.msra.mxu0 0.0
    %591 = vmatpush.msra.mxu0 0.0
    %592 = vmatpush.msra.mxu0 0.0
    %593 = vmatpush.msra.mxu0 0.0
    %594 = vmatpush.msra.mxu0 0.0
    %595 = vmatpush.msra.mxu0 %v192
    %596 = vmatpush.msra.mxu0 %v191
    %597 = vmatpush.msra.mxu0 %v190
    %598 = vmatpush.msra.mxu0 %v189
    %599 = vmatmul.f32.gmra.mxu0 %v581
    %v600 = vpop.f32.mrf.mxu0
    %v601 = vadd.f32 0.0, %v600
    %602 = vdwg.mxu0
    %v604 = vrot.slane %v601, 4
    %v606 = vadd.f32 %v234, %v604
    %v607 = vxor.u32 %v606, 2147483648
    %v608 = vmul.f32 %v607, 1.442695
    %v609 = vpow.pop %v608
    %v610 = vadd.f32 %v609, 1.0
    %v611 = vrcp.pop %v610
    %v612 = vmul.f32 %v610, %v611
    %v613 = vsub.f32 1.0, %v612
    %v614 = vmul.f32 %v611, %v613
    %v615 = vadd.f32 %v611, %v614
    %vm616 = vweird.f32 %v610
    %vm617 = vweird.f32 %v611
    %vm618 = vmor %vm616, %vm617
    %v619 = vsel %vm618, %v611, %v615
    %v620 = vand.u32 2147483647, %v610
    %vm621 = vcmp.eq.f32.partialorder %v620, 8.507059e+37
    %v622 = vand.u32 %v610, 2147483648
    %v623 = vor.u32 1.1754944e-38, %v622
    %v624 = vsel %vm621, %v623, %v619
    %v625 = vmul.f32 1.0, %v624
    %v626 = vtanh.pop %v606
    %v628 = vrot.slane %v571, 4
    %v630 = vmul.f32 %v625, %v628
    %632 = vrot.lane.b32.xlu0 %v626, 64
    %v633 = vpop.permute.xlu0 %632
    %v635 = vmul.f32 %v625, %v633
    %637 = vrot.lane.b32.xlu0 %v635, 32
    %v638 = vpop.permute.xlu0 %637
    %v640 = vadd.f32 %v630, %v638
    %v641 = vtanh.pop %v640
    %643 = vrot.lane.b32.xlu0 %v641, 64
    %v644 = vpop.permute.xlu0 %643
    %v646 = vmul.f32 %v625, %v644
    %v648 = vrot.slane %v646, 4
    %649 = vrot.lane.b32.xlu0 %v648, 32
    %v650 = vpop.permute.xlu0 %649
    %v651 = vsel %vm197, %v650, 0
    %653 = vmatpush.msra.mxu0 0.0
    %654 = vmatpush.msra.mxu0 0.0
    %655 = vmatpush.msra.mxu0 0.0
    %656 = vmatpush.msra.mxu0 0.0
    %657 = vmatpush.msra.mxu0 0.0
    %658 = vmatpush.msra.mxu0 0.0
    %659 = vmatpush.msra.mxu0 0.0
    %660 = vmatpush.msra.mxu0 0.0
    %661 = vmatpush.msra.mxu0 0.0
    %662 = vmatpush.msra.mxu0 0.0
    %663 = vmatpush.msra.mxu0 0.0
    %664 = vmatpush.msra.mxu0 0.0
    %665 = vmatpush.msra.mxu0 %v192
    %666 = vmatpush.msra.mxu0 %v191
    %667 = vmatpush.msra.mxu0 %v190
    %668 = vmatpush.msra.mxu0 %v189
    %669 = vmatmul.f32.gmra.mxu0 %v651
    %v670 = vpop.f32.mrf.mxu0
    %v671 = vadd.f32 0.0, %v670
    %672 = vdwg.mxu0
    %v673 = vadd.f32 %v237, %v671
    %v674 = vxor.u32 %v673, 2147483648
    %v675 = vmul.f32 %v674, 1.442695
    %v676 = vpow.pop %v675
    %v677 = vadd.f32 %v676, 1.0
    %v678 = vrcp.pop %v677
    %v679 = vmul.f32 %v677, %v678
    %v680 = vsub.f32 1.0, %v679
    %v681 = vmul.f32 %v678, %v680
    %v682 = vadd.f32 %v678, %v681
    %vm683 = vweird.f32 %v677
    %vm684 = vweird.f32 %v678
    %vm685 = vmor %vm683, %vm684
    %v686 = vsel %vm685, %v678, %v682
    %v687 = vand.u32 2147483647, %v677
    %vm688 = vcmp.eq.f32.partialorder %v687, 8.507059e+37
    %v689 = vand.u32 %v677, 2147483648
    %v690 = vor.u32 1.1754944e-38, %v689
    %v691 = vsel %vm688, %v690, %v686
    %v692 = vmul.f32 1.0, %v691
    %v693 = vtanh.pop %v673
    %v695 = vrot.slane %v640, 4
    %v697 = vmul.f32 %v692, %v695
    %699 = vrot.lane.b32.xlu0 %v693, 64
    %v700 = vpop.permute.xlu0 %699
    %v702 = vmul.f32 %v692, %v700
    %704 = vrot.lane.b32.xlu0 %v702, 32
    %v705 = vpop.permute.xlu0 %704
    %v707 = vadd.f32 %v697, %v705
    %v708 = vtanh.pop %v707
    %710 = vrot.lane.b32.xlu0 %v708, 64
    %v711 = vpop.permute.xlu0 %710
    %v713 = vmul.f32 %v692, %v711
    %715 = vrot.lane.b32.xlu0 %v713, 32
    %v716 = vpop.permute.xlu0 %715
    %v717 = vsel %vm197, %v716, 0
    %719 = vmatpush.msra.mxu0 0.0
    %720 = vmatpush.msra.mxu0 0.0
    %721 = vmatpush.msra.mxu0 0.0
    %722 = vmatpush.msra.mxu0 0.0
    %723 = vmatpush.msra.mxu0 0.0
    %724 = vmatpush.msra.mxu0 0.0
    %725 = vmatpush.msra.mxu0 0.0
    %726 = vmatpush.msra.mxu0 0.0
    %727 = vmatpush.msra.mxu0 0.0
    %728 = vmatpush.msra.mxu0 0.0
    %729 = vmatpush.msra.mxu0 0.0
    %730 = vmatpush.msra.mxu0 0.0
    %731 = vmatpush.msra.mxu0 %v192
    %732 = vmatpush.msra.mxu0 %v191
    %733 = vmatpush.msra.mxu0 %v190
    %734 = vmatpush.msra.mxu0 %v189
    %735 = vmatmul.f32.gmra.mxu0 %v717
    %v736 = vpop.f32.mrf.mxu0
    %v737 = vadd.f32 0.0, %v736
    %738 = vdwg.mxu0
    %v740 = vrot.slane %v737, 4
    %v742 = vadd.f32 %v237, %v740
    %v743 = vxor.u32 %v742, 2147483648
    %v744 = vmul.f32 %v743, 1.442695
    %v745 = vpow.pop %v744
    %v746 = vadd.f32 %v745, 1.0
    %v747 = vrcp.pop %v746
    %v748 = vmul.f32 %v746, %v747
    %v749 = vsub.f32 1.0, %v748
    %v750 = vmul.f32 %v747, %v749
    %v751 = vadd.f32 %v747, %v750
    %vm752 = vweird.f32 %v746
    %vm753 = vweird.f32 %v747
    %vm754 = vmor %vm752, %vm753
    %v755 = vsel %vm754, %v747, %v751
    %v756 = vand.u32 2147483647, %v746
    %vm757 = vcmp.eq.f32.partialorder %v756, 8.507059e+37
    %v758 = vand.u32 %v746, 2147483648
    %v759 = vor.u32 1.1754944e-38, %v758
    %v760 = vsel %vm757, %v759, %v755
    %v761 = vmul.f32 1.0, %v760
    %v762 = vtanh.pop %v742
    %v764 = vrot.slane %v707, 4
    %v766 = vmul.f32 %v761, %v764
    %768 = vrot.lane.b32.xlu0 %v762, 64
    %v769 = vpop.permute.xlu0 %768
    %v771 = vmul.f32 %v761, %v769
    %773 = vrot.lane.b32.xlu0 %v771, 32
    %v774 = vpop.permute.xlu0 %773
    %v776 = vadd.f32 %v766, %v774
    %v777 = vtanh.pop %v776
    %779 = vrot.lane.b32.xlu0 %v777, 64
    %v780 = vpop.permute.xlu0 %779
    %v782 = vmul.f32 %v761, %v780
    %784 = vrot.lane.b32.xlu0 %v782, 32
    %v785 = vpop.permute.xlu0 %784
    %vm787 = vcmask 261124
    %788 = vst.msk [vmem:[#allocation2 - $0x4] sm:$0xf0] %vm787, %v785
    %790 = vrot.lane.b32.xlu0 %v776, 96
    %v791 = vpop.permute.xlu0 %790
    %793 = vst.msk [vmem:[#allocation4 - $0x4] sm:$0xf0] %vm787, %v791
    %vm794 = vcmask 1043456
    %v795 = vsel %vm794, %v305, %v374
    %v796 = vsel %vm794, %v441, %v510
    %v797 = vsel %vm794, %v577, %v646
    %v798 = vsel %vm794, %v713, %v782
    %v799 = vld [vmem:[%s8] sm:$0xff]
    %v800 = vld [vmem:[%s8 + $0x8] sm:$0xff]
    %v801 = vld [vmem:[%s8 + $0x10] sm:$0xff]
    %v802 = vld [vmem:[%s8 + $0x18] sm:$0xff]
    %v803 = vld [vmem:[%s9] sm:$0xff]
    %v804 = vld [vmem:[%s9 + $0x8] sm:$0xff]
    %v805 = vld [vmem:[%s9 + $0x10] sm:$0xff]
    %v806 = vld [vmem:[%s9 + $0x18] sm:$0xff]
    %v807 = vld [vmem:[%s10] sm:$0x1]
    %v809 = vperm.slane %v807, 0
    %815 = vrot.lane.b32.xlu0 %v795, 32
    %v816 = vpop.permute.xlu0 %815
    %817 = vrot.lane.b32.xlu0 %v796, 32
    %v818 = vpop.permute.xlu0 %817
    %819 = vrot.lane.b32.xlu0 %v797, 32
    %v820 = vpop.permute.xlu0 %819
    %821 = vrot.lane.b32.xlu0 %v798, 32
    %v822 = vpop.permute.xlu0 %821
    %v823 = vsel %vm197, %v816, 0
    %v825 = vsel %vm197, %v818, 0
    %v827 = vsel %vm197, %v820, 0
    %v829 = vsel %vm197, %v822, 0
    %831 = vmatpush.msra.mxu0 0.0
    %832 = vmatpush.msra.mxu0 0.0
    %833 = vmatpush.msra.mxu0 0.0
    %834 = vmatpush.msra.mxu0 0.0
    %835 = vmatpush.msra.mxu0 0.0
    %836 = vmatpush.msra.mxu0 0.0
    %837 = vmatpush.msra.mxu0 0.0
    %838 = vmatpush.msra.mxu0 0.0
    %839 = vmatpush.msra.mxu0 0.0
    %840 = vmatpush.msra.mxu0 0.0
    %841 = vmatpush.msra.mxu0 0.0
    %842 = vmatpush.msra.mxu0 0.0
    %843 = vmatpush.msra.mxu0 %v802
    %844 = vmatpush.msra.mxu0 %v801
    %845 = vmatpush.msra.mxu0 %v800
    %846 = vmatpush.msra.mxu0 %v799
    %847 = vmatmul.f32.gmra.mxu0 %v823
    %v848 = vpop.f32.mrf.mxu0
    %v849 = vadd.f32 %v809, %v848
    %850 = vmatmul.f32.gmra.mxu0 %v825
    %v851 = vpop.f32.mrf.mxu0
    %v852 = vadd.f32 %v809, %v851
    %853 = vmatmul.f32.gmra.mxu0 %v827
    %v854 = vpop.f32.mrf.mxu0
    %v855 = vadd.f32 %v809, %v854
    %856 = vmatmul.f32.gmra.mxu0 %v829
    %v857 = vpop.f32.mrf.mxu0
    %v858 = vadd.f32 %v809, %v857
    %859 = vdwg.mxu0
    %s860 = scalar_lea.vmem %s2, 4
    %v861 = vld [vmem:[%s860] sm:$0xf]
    %s862 = scalar_lea.vmem %s3, 4
    %v863 = vld [vmem:[%s862] sm:$0xf]
    %v865 = vsel %vm197, %v861, 0
    %867 = vmatpush.msra.mxu0 0.0
    %868 = vmatpush.msra.mxu0 0.0
    %869 = vmatpush.msra.mxu0 0.0
    %870 = vmatpush.msra.mxu0 0.0
    %871 = vmatpush.msra.mxu0 0.0
    %872 = vmatpush.msra.mxu0 0.0
    %873 = vmatpush.msra.mxu0 0.0
    %874 = vmatpush.msra.mxu0 0.0
    %875 = vmatpush.msra.mxu0 0.0
    %876 = vmatpush.msra.mxu0 0.0
    %877 = vmatpush.msra.mxu0 0.0
    %878 = vmatpush.msra.mxu0 0.0
    %879 = vmatpush.msra.mxu0 %v806
    %880 = vmatpush.msra.mxu0 %v805
    %881 = vmatpush.msra.mxu0 %v804
    %882 = vmatpush.msra.mxu0 %v803
    %883 = vmatmul.f32.gmra.mxu0 %v865
    %v884 = vpop.f32.mrf.mxu0
    %v885 = vadd.f32 0.0, %v884
    %886 = vdwg.mxu0
    %v887 = vadd.f32 %v849, %v885
    %v888 = vxor.u32 %v887, 2147483648
    %v889 = vmul.f32 %v888, 1.442695
    %v890 = vpow.pop %v889
    %v891 = vadd.f32 %v890, 1.0
    %v892 = vrcp.pop %v891
    %v893 = vmul.f32 %v891, %v892
    %v894 = vsub.f32 1.0, %v893
    %v895 = vmul.f32 %v892, %v894
    %v896 = vadd.f32 %v892, %v895
    %vm897 = vweird.f32 %v891
    %vm898 = vweird.f32 %v892
    %vm899 = vmor %vm897, %vm898
    %v900 = vsel %vm899, %v892, %v896
    %v901 = vand.u32 2147483647, %v891
    %vm902 = vcmp.eq.f32.partialorder %v901, 8.507059e+37
    %v903 = vand.u32 %v891, 2147483648
    %v904 = vor.u32 1.1754944e-38, %v903
    %v905 = vsel %vm902, %v904, %v900
    %v906 = vmul.f32 1.0, %v905
    %v907 = vtanh.pop %v887
    %909 = vrot.lane.b32.xlu0 %v863, 32
    %v910 = vpop.permute.xlu0 %909
    %v912 = vmul.f32 %v906, %v910
    %914 = vrot.lane.b32.xlu0 %v907, 64
    %v915 = vpop.permute.xlu0 %914
    %v917 = vmul.f32 %v906, %v915
    %919 = vrot.lane.b32.xlu0 %v917, 32
    %v920 = vpop.permute.xlu0 %919
    %v922 = vadd.f32 %v912, %v920
    %v923 = vtanh.pop %v922
    %925 = vrot.lane.b32.xlu0 %v923, 64
    %v926 = vpop.permute.xlu0 %925
    %v928 = vmul.f32 %v906, %v926
    %930 = vrot.lane.b32.xlu0 %v928, 32
    %v931 = vpop.permute.xlu0 %930
    %v932 = vsel %vm197, %v931, 0
    %934 = vmatpush.msra.mxu0 0.0
    %935 = vmatpush.msra.mxu0 0.0
    %936 = vmatpush.msra.mxu0 0.0
    %937 = vmatpush.msra.mxu0 0.0
    %938 = vmatpush.msra.mxu0 0.0
    %939 = vmatpush.msra.mxu0 0.0
    %940 = vmatpush.msra.mxu0 0.0
    %941 = vmatpush.msra.mxu0 0.0
    %942 = vmatpush.msra.mxu0 0.0
    %943 = vmatpush.msra.mxu0 0.0
    %944 = vmatpush.msra.mxu0 0.0
    %945 = vmatpush.msra.mxu0 0.0
    %946 = vmatpush.msra.mxu0 %v806
    %947 = vmatpush.msra.mxu0 %v805
    %948 = vmatpush.msra.mxu0 %v804
    %949 = vmatpush.msra.mxu0 %v803
    %950 = vmatmul.f32.gmra.mxu0 %v932
    %v951 = vpop.f32.mrf.mxu0
    %v952 = vadd.f32 0.0, %v951
    %953 = vdwg.mxu0
    %v955 = vrot.slane %v952, 4
    %v957 = vadd.f32 %v849, %v955
    %v958 = vxor.u32 %v957, 2147483648
    %v959 = vmul.f32 %v958, 1.442695
    %v960 = vpow.pop %v959
    %v961 = vadd.f32 %v960, 1.0
    %v962 = vrcp.pop %v961
    %v963 = vmul.f32 %v961, %v962
    %v964 = vsub.f32 1.0, %v963
    %v965 = vmul.f32 %v962, %v964
    %v966 = vadd.f32 %v962, %v965
    %vm967 = vweird.f32 %v961
    %vm968 = vweird.f32 %v962
    %vm969 = vmor %vm967, %vm968
    %v970 = vsel %vm969, %v962, %v966
    %v971 = vand.u32 2147483647, %v961
    %vm972 = vcmp.eq.f32.partialorder %v971, 8.507059e+37
    %v973 = vand.u32 %v961, 2147483648
    %v974 = vor.u32 1.1754944e-38, %v973
    %v975 = vsel %vm972, %v974, %v970
    %v976 = vmul.f32 1.0, %v975
    %v977 = vtanh.pop %v957
    %v979 = vrot.slane %v922, 4
    %v981 = vmul.f32 %v976, %v979
    %983 = vrot.lane.b32.xlu0 %v977, 64
    %v984 = vpop.permute.xlu0 %983
    %v986 = vmul.f32 %v976, %v984
    %988 = vrot.lane.b32.xlu0 %v986, 32
    %v989 = vpop.permute.xlu0 %988
    %v991 = vadd.f32 %v981, %v989
    %v992 = vtanh.pop %v991
    %994 = vrot.lane.b32.xlu0 %v992, 64
    %v995 = vpop.permute.xlu0 %994
    %v997 = vmul.f32 %v976, %v995
    %v999 = vrot.slane %v997, 4
    %1000 = vrot.lane.b32.xlu0 %v999, 32
    %v1001 = vpop.permute.xlu0 %1000
    %v1002 = vsel %vm197, %v1001, 0
    %1004 = vmatpush.msra.mxu0 0.0
    %1005 = vmatpush.msra.mxu0 0.0
    %1006 = vmatpush.msra.mxu0 0.0
    %1007 = vmatpush.msra.mxu0 0.0
    %1008 = vmatpush.msra.mxu0 0.0
    %1009 = vmatpush.msra.mxu0 0.0
    %1010 = vmatpush.msra.mxu0 0.0
    %1011 = vmatpush.msra.mxu0 0.0
    %1012 = vmatpush.msra.mxu0 0.0
    %1013 = vmatpush.msra.mxu0 0.0
    %1014 = vmatpush.msra.mxu0 0.0
    %1015 = vmatpush.msra.mxu0 0.0
    %1016 = vmatpush.msra.mxu0 %v806
    %1017 = vmatpush.msra.mxu0 %v805
    %1018 = vmatpush.msra.mxu0 %v804
    %1019 = vmatpush.msra.mxu0 %v803
    %1020 = vmatmul.f32.gmra.mxu0 %v1002
    %v1021 = vpop.f32.mrf.mxu0
    %v1022 = vadd.f32 0.0, %v1021
    %1023 = vdwg.mxu0
    %v1024 = vadd.f32 %v852, %v1022
    %v1025 = vxor.u32 %v1024, 2147483648
    %v1026 = vmul.f32 %v1025, 1.442695
    %v1027 = vpow.pop %v1026
    %v1028 = vadd.f32 %v1027, 1.0
    %v1029 = vrcp.pop %v1028
    %v1030 = vmul.f32 %v1028, %v1029
    %v1031 = vsub.f32 1.0, %v1030
    %v1032 = vmul.f32 %v1029, %v1031
    %v1033 = vadd.f32 %v1029, %v1032
    %vm1034 = vweird.f32 %v1028
    %vm1035 = vweird.f32 %v1029
    %vm1036 = vmor %vm1034, %vm1035
    %v1037 = vsel %vm1036, %v1029, %v1033
    %v1038 = vand.u32 2147483647, %v1028
    %vm1039 = vcmp.eq.f32.partialorder %v1038, 8.507059e+37
    %v1040 = vand.u32 %v1028, 2147483648
    %v1041 = vor.u32 1.1754944e-38, %v1040
    %v1042 = vsel %vm1039, %v1041, %v1037
    %v1043 = vmul.f32 1.0, %v1042
    %v1044 = vtanh.pop %v1024
    %v1046 = vrot.slane %v991, 4
    %v1048 = vmul.f32 %v1043, %v1046
    %1050 = vrot.lane.b32.xlu0 %v1044, 64
    %v1051 = vpop.permute.xlu0 %1050
    %v1053 = vmul.f32 %v1043, %v1051
    %1055 = vrot.lane.b32.xlu0 %v1053, 32
    %v1056 = vpop.permute.xlu0 %1055
    %v1058 = vadd.f32 %v1048, %v1056
    %v1059 = vtanh.pop %v1058
    %1061 = vrot.lane.b32.xlu0 %v1059, 64
    %v1062 = vpop.permute.xlu0 %1061
    %v1064 = vmul.f32 %v1043, %v1062
    %1066 = vrot.lane.b32.xlu0 %v1064, 32
    %v1067 = vpop.permute.xlu0 %1066
    %v1068 = vsel %vm197, %v1067, 0
    %1070 = vmatpush.msra.mxu0 0.0
    %1071 = vmatpush.msra.mxu0 0.0
    %1072 = vmatpush.msra.mxu0 0.0
    %1073 = vmatpush.msra.mxu0 0.0
    %1074 = vmatpush.msra.mxu0 0.0
    %1075 = vmatpush.msra.mxu0 0.0
    %1076 = vmatpush.msra.mxu0 0.0
    %1077 = vmatpush.msra.mxu0 0.0
    %1078 = vmatpush.msra.mxu0 0.0
    %1079 = vmatpush.msra.mxu0 0.0
    %1080 = vmatpush.msra.mxu0 0.0
    %1081 = vmatpush.msra.mxu0 0.0
    %1082 = vmatpush.msra.mxu0 %v806
    %1083 = vmatpush.msra.mxu0 %v805
    %1084 = vmatpush.msra.mxu0 %v804
    %1085 = vmatpush.msra.mxu0 %v803
    %1086 = vmatmul.f32.gmra.mxu0 %v1068
    %v1087 = vpop.f32.mrf.mxu0
    %v1088 = vadd.f32 0.0, %v1087
    %1089 = vdwg.mxu0
    %v1091 = vrot.slane %v1088, 4
    %v1093 = vadd.f32 %v852, %v1091
    %v1094 = vxor.u32 %v1093, 2147483648
    %v1095 = vmul.f32 %v1094, 1.442695
    %v1096 = vpow.pop %v1095
    %v1097 = vadd.f32 %v1096, 1.0
    %v1098 = vrcp.pop %v1097
    %v1099 = vmul.f32 %v1097, %v1098
    %v1100 = vsub.f32 1.0, %v1099
    %v1101 = vmul.f32 %v1098, %v1100
    %v1102 = vadd.f32 %v1098, %v1101
    %vm1103 = vweird.f32 %v1097
    %vm1104 = vweird.f32 %v1098
    %vm1105 = vmor %vm1103, %vm1104
    %v1106 = vsel %vm1105, %v1098, %v1102
    %v1107 = vand.u32 2147483647, %v1097
    %vm1108 = vcmp.eq.f32.partialorder %v1107, 8.507059e+37
    %v1109 = vand.u32 %v1097, 2147483648
    %v1110 = vor.u32 1.1754944e-38, %v1109
    %v1111 = vsel %vm1108, %v1110, %v1106
    %v1112 = vmul.f32 1.0, %v1111
    %v1113 = vtanh.pop %v1093
    %v1115 = vrot.slane %v1058, 4
    %v1117 = vmul.f32 %v1112, %v1115
    %1119 = vrot.lane.b32.xlu0 %v1113, 64
    %v1120 = vpop.permute.xlu0 %1119
    %v1122 = vmul.f32 %v1112, %v1120
    %1124 = vrot.lane.b32.xlu0 %v1122, 32
    %v1125 = vpop.permute.xlu0 %1124
    %v1127 = vadd.f32 %v1117, %v1125
    %v1128 = vtanh.pop %v1127
    %1130 = vrot.lane.b32.xlu0 %v1128, 64
    %v1131 = vpop.permute.xlu0 %1130
    %v1133 = vmul.f32 %v1112, %v1131
    %v1135 = vrot.slane %v1133, 4
    %1136 = vrot.lane.b32.xlu0 %v1135, 32
    %v1137 = vpop.permute.xlu0 %1136
    %v1138 = vsel %vm197, %v1137, 0
    %1140 = vmatpush.msra.mxu0 0.0
    %1141 = vmatpush.msra.mxu0 0.0
    %1142 = vmatpush.msra.mxu0 0.0
    %1143 = vmatpush.msra.mxu0 0.0
    %1144 = vmatpush.msra.mxu0 0.0
    %1145 = vmatpush.msra.mxu0 0.0
    %1146 = vmatpush.msra.mxu0 0.0
    %1147 = vmatpush.msra.mxu0 0.0
    %1148 = vmatpush.msra.mxu0 0.0
    %1149 = vmatpush.msra.mxu0 0.0
    %1150 = vmatpush.msra.mxu0 0.0
    %1151 = vmatpush.msra.mxu0 0.0
    %1152 = vmatpush.msra.mxu0 %v806
    %1153 = vmatpush.msra.mxu0 %v805
    %1154 = vmatpush.msra.mxu0 %v804
    %1155 = vmatpush.msra.mxu0 %v803
    %1156 = vmatmul.f32.gmra.mxu0 %v1138
    %v1157 = vpop.f32.mrf.mxu0
    %v1158 = vadd.f32 0.0, %v1157
    %1159 = vdwg.mxu0
    %v1160 = vadd.f32 %v855, %v1158
    %v1161 = vxor.u32 %v1160, 2147483648
    %v1162 = vmul.f32 %v1161, 1.442695
    %v1163 = vpow.pop %v1162
    %v1164 = vadd.f32 %v1163, 1.0
    %v1165 = vrcp.pop %v1164
    %v1166 = vmul.f32 %v1164, %v1165
    %v1167 = vsub.f32 1.0, %v1166
    %v1168 = vmul.f32 %v1165, %v1167
    %v1169 = vadd.f32 %v1165, %v1168
    %vm1170 = vweird.f32 %v1164
    %vm1171 = vweird.f32 %v1165
    %vm1172 = vmor %vm1170, %vm1171
    %v1173 = vsel %vm1172, %v1165, %v1169
    %v1174 = vand.u32 2147483647, %v1164
    %vm1175 = vcmp.eq.f32.partialorder %v1174, 8.507059e+37
    %v1176 = vand.u32 %v1164, 2147483648
    %v1177 = vor.u32 1.1754944e-38, %v1176
    %v1178 = vsel %vm1175, %v1177, %v1173
    %v1179 = vmul.f32 1.0, %v1178
    %v1180 = vtanh.pop %v1160
    %v1182 = vrot.slane %v1127, 4
    %v1184 = vmul.f32 %v1179, %v1182
    %1186 = vrot.lane.b32.xlu0 %v1180, 64
    %v1187 = vpop.permute.xlu0 %1186
    %v1189 = vmul.f32 %v1179, %v1187
    %1191 = vrot.lane.b32.xlu0 %v1189, 32
    %v1192 = vpop.permute.xlu0 %1191
    %v1194 = vadd.f32 %v1184, %v1192
    %v1195 = vtanh.pop %v1194
    %1197 = vrot.lane.b32.xlu0 %v1195, 64
    %v1198 = vpop.permute.xlu0 %1197
    %v1200 = vmul.f32 %v1179, %v1198
    %1202 = vrot.lane.b32.xlu0 %v1200, 32
    %v1203 = vpop.permute.xlu0 %1202
    %v1204 = vsel %vm197, %v1203, 0
    %1206 = vmatpush.msra.mxu0 0.0
    %1207 = vmatpush.msra.mxu0 0.0
    %1208 = vmatpush.msra.mxu0 0.0
    %1209 = vmatpush.msra.mxu0 0.0
    %1210 = vmatpush.msra.mxu0 0.0
    %1211 = vmatpush.msra.mxu0 0.0
    %1212 = vmatpush.msra.mxu0 0.0
    %1213 = vmatpush.msra.mxu0 0.0
    %1214 = vmatpush.msra.mxu0 0.0
    %1215 = vmatpush.msra.mxu0 0.0
    %1216 = vmatpush.msra.mxu0 0.0
    %1217 = vmatpush.msra.mxu0 0.0
    %1218 = vmatpush.msra.mxu0 %v806
    %1219 = vmatpush.msra.mxu0 %v805
    %1220 = vmatpush.msra.mxu0 %v804
    %1221 = vmatpush.msra.mxu0 %v803
    %1222 = vmatmul.f32.gmra.mxu0 %v1204
    %v1223 = vpop.f32.mrf.mxu0
    %v1224 = vadd.f32 0.0, %v1223
    %1225 = vdwg.mxu0
    %v1227 = vrot.slane %v1224, 4
    %v1229 = vadd.f32 %v855, %v1227
    %v1230 = vxor.u32 %v1229, 2147483648
    %v1231 = vmul.f32 %v1230, 1.442695
    %v1232 = vpow.pop %v1231
    %v1233 = vadd.f32 %v1232, 1.0
    %v1234 = vrcp.pop %v1233
    %v1235 = vmul.f32 %v1233, %v1234
    %v1236 = vsub.f32 1.0, %v1235
    %v1237 = vmul.f32 %v1234, %v1236
    %v1238 = vadd.f32 %v1234, %v1237
    %vm1239 = vweird.f32 %v1233
    %vm1240 = vweird.f32 %v1234
    %vm1241 = vmor %vm1239, %vm1240
    %v1242 = vsel %vm1241, %v1234, %v1238
    %v1243 = vand.u32 2147483647, %v1233
    %vm1244 = vcmp.eq.f32.partialorder %v1243, 8.507059e+37
    %v1245 = vand.u32 %v1233, 2147483648
    %v1246 = vor.u32 1.1754944e-38, %v1245
    %v1247 = vsel %vm1244, %v1246, %v1242
    %v1248 = vmul.f32 1.0, %v1247
    %v1249 = vtanh.pop %v1229
    %v1251 = vrot.slane %v1194, 4
    %v1253 = vmul.f32 %v1248, %v1251
    %1255 = vrot.lane.b32.xlu0 %v1249, 64
    %v1256 = vpop.permute.xlu0 %1255
    %v1258 = vmul.f32 %v1248, %v1256
    %1260 = vrot.lane.b32.xlu0 %v1258, 32
    %v1261 = vpop.permute.xlu0 %1260
    %v1263 = vadd.f32 %v1253, %v1261
    %v1264 = vtanh.pop %v1263
    %1266 = vrot.lane.b32.xlu0 %v1264, 64
    %v1267 = vpop.permute.xlu0 %1266
    %v1269 = vmul.f32 %v1248, %v1267
    %v1271 = vrot.slane %v1269, 4
    %1272 = vrot.lane.b32.xlu0 %v1271, 32
    %v1273 = vpop.permute.xlu0 %1272
    %v1274 = vsel %vm197, %v1273, 0
    %1276 = vmatpush.msra.mxu0 0.0
    %1277 = vmatpush.msra.mxu0 0.0
    %1278 = vmatpush.msra.mxu0 0.0
    %1279 = vmatpush.msra.mxu0 0.0
    %1280 = vmatpush.msra.mxu0 0.0
    %1281 = vmatpush.msra.mxu0 0.0
    %1282 = vmatpush.msra.mxu0 0.0
    %1283 = vmatpush.msra.mxu0 0.0
    %1284 = vmatpush.msra.mxu0 0.0
    %1285 = vmatpush.msra.mxu0 0.0
    %1286 = vmatpush.msra.mxu0 0.0
    %1287 = vmatpush.msra.mxu0 0.0
    %1288 = vmatpush.msra.mxu0 %v806
    %1289 = vmatpush.msra.mxu0 %v805
    %1290 = vmatpush.msra.mxu0 %v804
    %1291 = vmatpush.msra.mxu0 %v803
    %1292 = vmatmul.f32.gmra.mxu0 %v1274
    %v1293 = vpop.f32.mrf.mxu0
    %v1294 = vadd.f32 0.0, %v1293
    %1295 = vdwg.mxu0
    %v1296 = vadd.f32 %v858, %v1294
    %v1297 = vxor.u32 %v1296, 2147483648
    %v1298 = vmul.f32 %v1297, 1.442695
    %v1299 = vpow.pop %v1298
    %v1300 = vadd.f32 %v1299, 1.0
    %v1301 = vrcp.pop %v1300
    %v1302 = vmul.f32 %v1300, %v1301
    %v1303 = vsub.f32 1.0, %v1302
    %v1304 = vmul.f32 %v1301, %v1303
    %v1305 = vadd.f32 %v1301, %v1304
    %vm1306 = vweird.f32 %v1300
    %vm1307 = vweird.f32 %v1301
    %vm1308 = vmor %vm1306, %vm1307
    %v1309 = vsel %vm1308, %v1301, %v1305
    %v1310 = vand.u32 2147483647, %v1300
    %vm1311 = vcmp.eq.f32.partialorder %v1310, 8.507059e+37
    %v1312 = vand.u32 %v1300, 2147483648
    %v1313 = vor.u32 1.1754944e-38, %v1312
    %v1314 = vsel %vm1311, %v1313, %v1309
    %v1315 = vmul.f32 1.0, %v1314
    %v1316 = vtanh.pop %v1296
    %v1318 = vrot.slane %v1263, 4
    %v1320 = vmul.f32 %v1315, %v1318
    %1322 = vrot.lane.b32.xlu0 %v1316, 64
    %v1323 = vpop.permute.xlu0 %1322
    %v1325 = vmul.f32 %v1315, %v1323
    %1327 = vrot.lane.b32.xlu0 %v1325, 32
    %v1328 = vpop.permute.xlu0 %1327
    %v1330 = vadd.f32 %v1320, %v1328
    %v1331 = vtanh.pop %v1330
    %1333 = vrot.lane.b32.xlu0 %v1331, 64
    %v1334 = vpop.permute.xlu0 %1333
    %v1336 = vmul.f32 %v1315, %v1334
    %1338 = vrot.lane.b32.xlu0 %v1336, 32
    %v1339 = vpop.permute.xlu0 %1338
    %v1340 = vsel %vm197, %v1339, 0
    %1342 = vmatpush.msra.mxu0 0.0
    %1343 = vmatpush.msra.mxu0 0.0
    %1344 = vmatpush.msra.mxu0 0.0
    %1345 = vmatpush.msra.mxu0 0.0
    %1346 = vmatpush.msra.mxu0 0.0
    %1347 = vmatpush.msra.mxu0 0.0
    %1348 = vmatpush.msra.mxu0 0.0
    %1349 = vmatpush.msra.mxu0 0.0
    %1350 = vmatpush.msra.mxu0 0.0
    %1351 = vmatpush.msra.mxu0 0.0
    %1352 = vmatpush.msra.mxu0 0.0
    %1353 = vmatpush.msra.mxu0 0.0
    %1354 = vmatpush.msra.mxu0 %v806
    %1355 = vmatpush.msra.mxu0 %v805
    %1356 = vmatpush.msra.mxu0 %v804
    %1357 = vmatpush.msra.mxu0 %v803
    %1358 = vmatmul.f32.gmra.mxu0 %v1340
    %v1359 = vpop.f32.mrf.mxu0
    %v1360 = vadd.f32 0.0, %v1359
    %1361 = vdwg.mxu0
    %v1363 = vrot.slane %v1360, 4
    %v1365 = vadd.f32 %v858, %v1363
    %v1366 = vxor.u32 %v1365, 2147483648
    %v1367 = vmul.f32 %v1366, 1.442695
    %v1368 = vpow.pop %v1367
    %v1369 = vadd.f32 %v1368, 1.0
    %v1370 = vrcp.pop %v1369
    %v1371 = vmul.f32 %v1369, %v1370
    %v1372 = vsub.f32 1.0, %v1371
    %v1373 = vmul.f32 %v1370, %v1372
    %v1374 = vadd.f32 %v1370, %v1373
    %vm1375 = vweird.f32 %v1369
    %vm1376 = vweird.f32 %v1370
    %vm1377 = vmor %vm1375, %vm1376
    %v1378 = vsel %vm1377, %v1370, %v1374
    %v1379 = vand.u32 2147483647, %v1369
    %vm1380 = vcmp.eq.f32.partialorder %v1379, 8.507059e+37
    %v1381 = vand.u32 %v1369, 2147483648
    %v1382 = vor.u32 1.1754944e-38, %v1381
    %v1383 = vsel %vm1380, %v1382, %v1378
    %v1384 = vmul.f32 1.0, %v1383
    %v1385 = vtanh.pop %v1365
    %v1387 = vrot.slane %v1330, 4
    %v1389 = vmul.f32 %v1384, %v1387
    %1391 = vrot.lane.b32.xlu0 %v1385, 64
    %v1392 = vpop.permute.xlu0 %1391
    %v1394 = vmul.f32 %v1384, %v1392
    %1396 = vrot.lane.b32.xlu0 %v1394, 32
    %v1397 = vpop.permute.xlu0 %1396
    %v1399 = vadd.f32 %v1389, %v1397
    %v1400 = vtanh.pop %v1399
    %1402 = vrot.lane.b32.xlu0 %v1400, 64
    %v1403 = vpop.permute.xlu0 %1402
    %v1405 = vmul.f32 %v1384, %v1403
    %1407 = vrot.lane.b32.xlu0 %v1405, 32
    %v1408 = vpop.permute.xlu0 %1407
    %s1410 = scalar_lea.vmem [#allocation2], 4
    %1411 = vst.msk [vmem:[%s1410 - $0x4] sm:$0xf0] %vm787, %v1408
    %1413 = vrot.lane.b32.xlu0 %v1399, 96
    %v1414 = vpop.permute.xlu0 %1413
    %s1416 = scalar_lea.vmem [#allocation4], 4
    %1417 = vst.msk [vmem:[%s1416 - $0x4] sm:$0xf0] %vm787, %v1414
    %v1418 = vsel %vm794, %v928, %v997
    %v1419 = vsel %vm794, %v1064, %v1133
    %v1420 = vsel %vm794, %v1200, %v1269
    %v1421 = vsel %vm794, %v1336, %v1405
    %v1422 = vld [vmem:[%s11] sm:$0xff]
    %v1423 = vld [vmem:[%s11 + $0x8] sm:$0xff]
    %v1424 = vld [vmem:[%s11 + $0x10] sm:$0xff]
    %v1425 = vld [vmem:[%s11 + $0x18] sm:$0xff]
    %v1426 = vld [vmem:[%s11 + $0x20] sm:$0xff]
    %v1427 = vld [vmem:[%s11 + $0x28] sm:$0xff]
    %v1428 = vld [vmem:[%s11 + $0x30] sm:$0xff]
    %v1429 = vld [vmem:[%s11 + $0x38] sm:$0xff]
    %v1430 = vld [vmem:[%s4] sm:$0xff]
    %v1431 = vld [vmem:[%s4 + $0x8] sm:$0xff]
    %v1432 = vld [vmem:[%s4 + $0x10] sm:$0xff]
    %v1433 = vld [vmem:[%s4 + $0x18] sm:$0xff]
    %v1434 = vld [vmem:[%s12] sm:$0xff]
    %v1435 = vld [vmem:[%s12 + $0x8] sm:$0xff]
    %v1436 = vld [vmem:[%s12 + $0x10] sm:$0xff]
    %v1437 = vld [vmem:[%s12 + $0x18] sm:$0xff]
    %vm1438 = vcmask 130048
    %v1440 = vsel %vm1438, %v1430, 0
    %v1443 = vsel %vm1438, %v1431, 0
    %v1446 = vsel %vm1438, %v1432, 0
    %v1449 = vsel %vm1438, %v1433, 0
    %1451 = vmatpush.msra.mxu0 0.0
    %1452 = vmatpush.msra.mxu0 0.0
    %1453 = vmatpush.msra.mxu0 0.0
    %1454 = vmatpush.msra.mxu0 0.0
    %1455 = vmatpush.msra.mxu0 0.0
    %1456 = vmatpush.msra.mxu0 0.0
    %1457 = vmatpush.msra.mxu0 0.0
    %1458 = vmatpush.msra.mxu0 0.0
    %1459 = vmatpush.msra.mxu0 0.0
    %1460 = vmatpush.msra.mxu0 0.0
    %1461 = vmatpush.msra.mxu0 0.0
    %1462 = vmatpush.msra.mxu0 0.0
    %1463 = vmatpush.msra.mxu0 0.0
    %1464 = vmatpush.msra.mxu0 0.0
    %1465 = vmatpush.msra.mxu0 %v1436
    %1466 = vmatpush.msra.mxu0 %v1434
    %1467 = vmatmul.f32.gmra.mxu0 %v1440
    %v1468 = vpop.f32.mrf.mxu0
    %v1469 = vadd.f32 0.0, %v1468
    %1470 = vmatmul.f32.gmra.mxu0 %v1443
    %v1471 = vpop.f32.mrf.mxu0
    %v1472 = vadd.f32 0.0, %v1471
    %1473 = vmatmul.f32.gmra.mxu0 %v1446
    %v1474 = vpop.f32.mrf.mxu0
    %v1475 = vadd.f32 0.0, %v1474
    %1476 = vmatmul.f32.gmra.mxu0 %v1449
    %v1477 = vpop.f32.mrf.mxu0
    %v1478 = vadd.f32 0.0, %v1477
    %1479 = vdwg.mxu0
    %1480 = vmatpush.msra.mxu0 0.0
    %1481 = vmatpush.msra.mxu0 0.0
    %1482 = vmatpush.msra.mxu0 0.0
    %1483 = vmatpush.msra.mxu0 0.0
    %1484 = vmatpush.msra.mxu0 0.0
    %1485 = vmatpush.msra.mxu0 0.0
    %1486 = vmatpush.msra.mxu0 0.0
    %1487 = vmatpush.msra.mxu0 0.0
    %1488 = vmatpush.msra.mxu0 0.0
    %1489 = vmatpush.msra.mxu0 0.0
    %1490 = vmatpush.msra.mxu0 0.0
    %1491 = vmatpush.msra.mxu0 0.0
    %1492 = vmatpush.msra.mxu0 0.0
    %1493 = vmatpush.msra.mxu0 0.0
    %1494 = vmatpush.msra.mxu0 %v1437
    %1495 = vmatpush.msra.mxu0 %v1435
    %1496 = vmatmul.f32.gmra.mxu0 %v1440
    %v1497 = vpop.f32.mrf.mxu0
    %v1498 = vadd.f32 0.0, %v1497
    %1499 = vmatmul.f32.gmra.mxu0 %v1443
    %v1500 = vpop.f32.mrf.mxu0
    %v1501 = vadd.f32 0.0, %v1500
    %1502 = vmatmul.f32.gmra.mxu0 %v1446
    %v1503 = vpop.f32.mrf.mxu0
    %v1504 = vadd.f32 0.0, %v1503
    %1505 = vmatmul.f32.gmra.mxu0 %v1449
    %v1506 = vpop.f32.mrf.mxu0
    %v1507 = vadd.f32 0.0, %v1506
    %1508 = vdwg.mxu0
    %1513 = vrot.lane.b32.xlu0 %v1418, 32
    %v1514 = vpop.permute.xlu0 %1513
    %1515 = vrot.lane.b32.xlu0 %v1419, 32
    %v1516 = vpop.permute.xlu0 %1515
    %1517 = vrot.lane.b32.xlu0 %v1420, 32
    %v1518 = vpop.permute.xlu0 %1517
    %1519 = vrot.lane.b32.xlu0 %v1421, 32
    %v1520 = vpop.permute.xlu0 %1519
    %v1521 = vsel %vm197, %v1514, 0
    %v1523 = vsel %vm197, %v1516, 0
    %v1525 = vsel %vm197, %v1518, 0
    %v1527 = vsel %vm197, %v1520, 0
    %1529 = vmatpush.msra.mxu0 0.0
    %1530 = vmatpush.msra.mxu0 0.0
    %1531 = vmatpush.msra.mxu0 0.0
    %1532 = vmatpush.msra.mxu0 0.0
    %1533 = vmatpush.msra.mxu0 0.0
    %1534 = vmatpush.msra.mxu0 0.0
    %1535 = vmatpush.msra.mxu0 0.0
    %1536 = vmatpush.msra.mxu0 0.0
    %1537 = vmatpush.msra.mxu0 0.0
    %1538 = vmatpush.msra.mxu0 0.0
    %1539 = vmatpush.msra.mxu0 0.0
    %1540 = vmatpush.msra.mxu0 0.0
    %1541 = vmatpush.msra.mxu0 %v1428
    %1542 = vmatpush.msra.mxu0 %v1426
    %1543 = vmatpush.msra.mxu0 %v1424
    %1544 = vmatpush.msra.mxu0 %v1422
    %1545 = vmatmul.f32.gmra.mxu0 %v1521
    %v1546 = vpop.f32.mrf.mxu0
    %v1547 = vadd.f32 %v1469, %v1546
    %1548 = vmatmul.f32.gmra.mxu0 %v1523
    %v1549 = vpop.f32.mrf.mxu0
    %v1550 = vadd.f32 %v1472, %v1549
    %1551 = vmatmul.f32.gmra.mxu0 %v1525
    %v1552 = vpop.f32.mrf.mxu0
    %v1553 = vadd.f32 %v1475, %v1552
    %1554 = vmatmul.f32.gmra.mxu0 %v1527
    %v1555 = vpop.f32.mrf.mxu0
    %v1556 = vadd.f32 %v1478, %v1555
    %1557 = vdwg.mxu0
    %1558 = vmatpush.msra.mxu0 0.0
    %1559 = vmatpush.msra.mxu0 0.0
    %1560 = vmatpush.msra.mxu0 0.0
    %1561 = vmatpush.msra.mxu0 0.0
    %1562 = vmatpush.msra.mxu0 0.0
    %1563 = vmatpush.msra.mxu0 0.0
    %1564 = vmatpush.msra.mxu0 0.0
    %1565 = vmatpush.msra.mxu0 0.0
    %1566 = vmatpush.msra.mxu0 0.0
    %1567 = vmatpush.msra.mxu0 0.0
    %1568 = vmatpush.msra.mxu0 0.0
    %1569 = vmatpush.msra.mxu0 0.0
    %1570 = vmatpush.msra.mxu0 %v1429
    %1571 = vmatpush.msra.mxu0 %v1427
    %1572 = vmatpush.msra.mxu0 %v1425
    %1573 = vmatpush.msra.mxu0 %v1423
    %1574 = vmatmul.f32.gmra.mxu0 %v1521
    %v1575 = vpop.f32.mrf.mxu0
    %v1576 = vadd.f32 %v1498, %v1575
    %1577 = vmatmul.f32.gmra.mxu0 %v1523
    %v1578 = vpop.f32.mrf.mxu0
    %v1579 = vadd.f32 %v1501, %v1578
    %1580 = vmatmul.f32.gmra.mxu0 %v1525
    %v1581 = vpop.f32.mrf.mxu0
    %v1582 = vadd.f32 %v1504, %v1581
    %1583 = vmatmul.f32.gmra.mxu0 %v1527
    %v1584 = vpop.f32.mrf.mxu0
    %v1585 = vadd.f32 %v1507, %v1584
    %1586 = vdwg.mxu0
    %v1587 = vld [vmem:[%s13] sm:$0x3]
    %v1589 = vperm.slane %v1587, 0
    %v1590 = vperm.slane %v1587, 1
    %v1593 = vadd.f32 %v1547, %v1589
    %v1594 = vadd.f32 %v1576, %v1590
    %v1595 = vadd.f32 %v1550, %v1589
    %v1596 = vadd.f32 %v1579, %v1590
    %v1597 = vadd.f32 %v1553, %v1589
    %v1598 = vadd.f32 %v1582, %v1590
    %v1599 = vadd.f32 %v1556, %v1589
    %v1600 = vadd.f32 %v1585, %v1590
    %v1601 = vmax.f32 %v1593, %v1594
    %1602 = vmax.xlane.f32.xlu0 %v1601
    %v1603 = vpop.xlane.xlu0 %1602
    %v1604 = vmax.f32 %v1595, %v1596
    %1605 = vmax.xlane.f32.xlu0 %v1604
    %v1606 = vpop.xlane.xlu0 %1605
    %v1607 = vmax.f32 %v1597, %v1598
    %1608 = vmax.xlane.f32.xlu0 %v1607
    %v1609 = vpop.xlane.xlu0 %1608
    %v1610 = vmax.f32 %v1599, %v1600
    %1611 = vmax.xlane.f32.xlu0 %v1610
    %v1612 = vpop.xlane.xlu0 %1611
    %v1613 = vsub.f32 %v1593, %v1603
    %v1614 = vsub.f32 %v1594, %v1603
    %v1615 = vsub.f32 %v1595, %v1606
    %v1616 = vsub.f32 %v1596, %v1606
    %v1617 = vsub.f32 %v1597, %v1609
    %v1618 = vsub.f32 %v1598, %v1609
    %v1619 = vsub.f32 %v1599, %v1612
    %v1620 = vsub.f32 %v1600, %v1612
    %v1621 = vmul.f32 %v1613, 1.442695
    %v1622 = vpow.pop %v1621
    %v1623 = vmul.f32 %v1614, 1.442695
    %v1624 = vpow.pop %v1623
    %v1625 = vmul.f32 %v1615, 1.442695
    %v1626 = vpow.pop %v1625
    %v1627 = vmul.f32 %v1616, 1.442695
    %v1628 = vpow.pop %v1627
    %v1629 = vmul.f32 %v1617, 1.442695
    %v1630 = vpow.pop %v1629
    %v1631 = vmul.f32 %v1618, 1.442695
    %v1632 = vpow.pop %v1631
    %v1633 = vmul.f32 %v1619, 1.442695
    %v1634 = vpow.pop %v1633
    %v1635 = vmul.f32 %v1620, 1.442695
    %v1636 = vpow.pop %v1635
    %v1637 = vadd.f32 %v1622, %v1624
    %1638 = vadd.xlane.f32.xlu0 %v1637
    %v1639 = vpop.xlane.xlu0 %1638
    %v1640 = vadd.f32 %v1626, %v1628
    %1641 = vadd.xlane.f32.xlu0 %v1640
    %v1642 = vpop.xlane.xlu0 %1641
    %v1643 = vadd.f32 %v1630, %v1632
    %1644 = vadd.xlane.f32.xlu0 %v1643
    %v1645 = vpop.xlane.xlu0 %1644
    %v1646 = vadd.f32 %v1634, %v1636
    %1647 = vadd.xlane.f32.xlu0 %v1646
    %v1648 = vpop.xlane.xlu0 %1647
    %v1649 = vlog2.pop %v1639
    %v1650 = vmul.f32 %v1649, 0.6931472
    %v1651 = vlog2.pop %v1642
    %v1652 = vmul.f32 %v1651, 0.6931472
    %v1653 = vlog2.pop %v1645
    %v1654 = vmul.f32 %v1653, 0.6931472
    %v1655 = vlog2.pop %v1648
    %v1656 = vmul.f32 %v1655, 0.6931472
    %v1657 = vsub.f32 %v1613, %v1650
    %v1658 = vsub.f32 %v1614, %v1650
    %v1659 = vsub.f32 %v1615, %v1652
    %v1660 = vsub.f32 %v1616, %v1652
    %v1661 = vsub.f32 %v1617, %v1654
    %v1662 = vsub.f32 %v1618, %v1654
    %v1663 = vsub.f32 %v1619, %v1656
    %v1664 = vsub.f32 %v1620, %v1656
    %1665 = vst [vmem:[%s14] sm:$0xff] %v1657
    %1666 = vst [vmem:[%s14 + $0x8] sm:$0xff] %v1658
    %1667 = vst [vmem:[%s14 + $0x10] sm:$0xff] %v1659
    %1668 = vst [vmem:[%s14 + $0x18] sm:$0xff] %v1660
    %1669 = vst [vmem:[%s14 + $0x20] sm:$0xff] %v1661
    %1670 = vst [vmem:[%s14 + $0x28] sm:$0xff] %v1662
    %1671 = vst [vmem:[%s14 + $0x30] sm:$0xff] %v1663
    %1672 = vst [vmem:[%s14 + $0x38] sm:$0xff] %v1664
    // Predicated region
    $region58: #{output_enhanced_lm_forward.1} parent=1 // pred_check
      _
    $region59: #{output_enhanced_lm_forward.1} parent=1 // pred_check_branch
      %1674 = sbr.rel (0) target = $region61
    $region60: #{output_enhanced_lm_forward.1} parent=1 // pred_region
      _
    $region61: #{output_enhanced_lm_forward.1} parent=1 // pred_fallthru
      _
    // Predicated region
    $region62: #{output_enhanced_lm_forward.1} parent=1 // pred_check
      _
    $region63: #{output_enhanced_lm_forward.1} parent=1 // pred_check_branch
      %1676 = sbr.rel (0) target = $region65
    $region64: #{output_enhanced_lm_forward.1} parent=1 // pred_region
      %1678 = vsyncadd [#allocation3], 0
      %s1679 = sshll.u32 [#allocation2], 4
      %s1680 = int_to_ptr.vmem [resolvable:$true] %s1679
      %s1681 = sshll.u32 %s15, 4
      %s1682 = int_to_ptr.hbm [resolvable:$true] %s1681
      %1687 = dma.vmem_to_hbm [thread:$0]  %s1680, 128, %s1682, [#allocation3], 64, 64, 4
    $region65: #{output_enhanced_lm_forward.1} parent=1 // pred_fallthru
      _
    // Predicated region
    $region66: #{output_enhanced_lm_forward.1} parent=1 // pred_check
      _
    $region67: #{output_enhanced_lm_forward.1} parent=1 // pred_check_branch
      %1689 = sbr.rel (0) target = $region69
    $region68: #{output_enhanced_lm_forward.1} parent=1 // pred_region
      %1691 = vsyncadd [#allocation5], 0
      %s1692 = sshll.u32 [#allocation4], 4
      %s1693 = int_to_ptr.vmem [resolvable:$true] %s1692
      %s1694 = sshll.u32 %s16, 4
      %s1695 = int_to_ptr.hbm [resolvable:$true] %s1694
      %1700 = dma.vmem_to_hbm [thread:$0]  %s1693, 128, %s1695, [#allocation5], 64, 64, 4
    $region69: #{output_enhanced_lm_forward.1} parent=1 // pred_fallthru
      _
    // Predicated region
    $region70: #{output_enhanced_lm_forward.1} parent=1 // pred_check
      _
    $region71: #{output_enhanced_lm_forward.1} parent=1 // pred_check_branch
      %1702 = sbr.rel (0) target = $region73
    $region72: #{output_enhanced_lm_forward.1} parent=1 // pred_region
      _
    $region73: #{output_enhanced_lm_forward.1} parent=1 // pred_fallthru
      _
    // Predicated region
    $region74: #{output_enhanced_lm_forward.1} parent=1 // pred_check
      _
    $region75: #{output_enhanced_lm_forward.1} parent=1 // pred_check_branch
      %1704 = sbr.rel (0) target = $region77
    $region76: #{output_enhanced_lm_forward.1} parent=1 // pred_region
      %1706 = dma.done [#allocation3], 128
    $region77: #{output_enhanced_lm_forward.1} parent=1 // pred_fallthru
      _
    // Predicated region
    $region78: #{output_enhanced_lm_forward.1} parent=1 // pred_check
      _
    $region79: #{output_enhanced_lm_forward.1} parent=1 // pred_check_branch
      %1708 = sbr.rel (0) target = $region81
    $region80: #{output_enhanced_lm_forward.1} parent=1 // pred_region
      %1710 = dma.done [#allocation5], 128
    $region81: #{output_enhanced_lm_forward.1} parent=1 // pred_fallthru
      _
    %1711 = vsyncpa [#allocation3], 1
    %1712 = vsyncpa [#allocation5], 1

</llo_original>
